<compile_context>
chip_gen: v6e
topology: v6e:2x2x1
jax: 0.10.0
libtpu: 0.0.40
codegen_flags: <defaults>
</compile_context>

<pallas_src>
import jax
import jax.numpy as jnp
import numpy as np
from jax.experimental import pallas as pl
from jax.experimental.pallas import tpu as pltpu


# ------------------------------ Pallas kernel --------------------------------
def _unet_up_kernel(x_ref, ske_ref, sko_ref, wup_ref, w1m_ref, w1h_ref,
                    w2m_ref, w2h_ref, bias_ref, o_ref, xf, f1, f2):
    # x_ref:    (N, H, W*Cin)        bf16   inputs0 rows, lane = iw*Cin + ci
    # ske_ref:  (N, H, 2W*Cs)        bf16   skip rows 0,2,4,... (even plane)
    # sko_ref:  (N, H, 2W*Cs)        bf16   skip rows 1,3,5,... (odd  plane)
    # wup_ref:  (W*Cin, 4*2W*Cout)   bf16   deconv spread weights [W0|W1|W2|W3]
    # w1m_ref:  (2E, 2*2W*Cout)      bf16   conv1 main weights, E = 2W*(Cout+Cs)
    # w1h_ref:  (E, 2*2W*Cout)       bf16   conv1 halo-row weights [even|odd]
    # w2m_ref:  (2*2W*Cout, 2*2W*Cout) bf16 conv2 main weights
    # w2h_ref:  (2W*Cout, 2*2W*Cout) bf16   conv2 halo-row weights
    # bias_ref: (3, 2W*Cout)         f32    [up, conv1, conv2] biases (W-tiled)
    # o_ref:    (N, H, 2*2W*Cout)    bf16   lanes = [even-row plane | odd plane]
    # xf:       (N, H+2, W*Cin)      bf16 scratch  deconv input  + row halos
    # f1:       (N, H+2, 2E)         bf16 scratch  conv1 input   + row halos
    #                                      lanes = [z0 | skip_e | z1 | skip_o]
    # f2:       (N, H+2, 2*2W*Cout)  bf16 scratch  conv2 input   + row halos
    #                                      lanes = [c1_e | c1_o]
    f32, bf16 = jnp.float32, jnp.bfloat16
    n, h, wcin = x_ref.shape
    nco = o_ref.shape[2] // 2          # 2W*Cout lanes per parity plane
    ncs = ske_ref.shape[2]             # 2W*Cs lanes
    e = nco + ncs                      # one parity plane of the fused concat
    nh = n * h

    def mm(a, b):
        return jnp.dot(a, b, preferred_element_type=f32)

    def flat(v):                       # (N, H, K) -> (N*H, K): trivial relabel
        return v.reshape(nh, v.shape[2])

    # ---- zero halo rows of the scratch frames (single grid step => once) ----
    xf[:, 0:1, :] = jnp.zeros((n, 1, wcin), bf16)
    xf[:, h + 1:h + 2, :] = jnp.zeros((n, 1, wcin), bf16)
    f1[:, 0:1, :] = jnp.zeros((n, 1, 2 * e), bf16)
    f1[:, h + 1:h + 2, :] = jnp.zeros((n, 1, 2 * e), bf16)
    f2[:, 0:1, :] = jnp.zeros((n, 1, 2 * nco), bf16)
    f2[:, h + 1:h + 2, :] = jnp.zeros((n, 1, 2 * nco), bf16)

    # interiors that come straight from the inputs
    xf[:, 1:h + 1, :] = x_ref[...]
    f1[:, 1:h + 1, nco:e] = ske_ref[...]          # skip half, even output rows
    f1[:, 1:h + 1, e + nco:] = sko_ref[...]       # skip half, odd  output rows

    # ---- ConvTranspose2d(k=4,s=2,p=1): row-parity (sub-pixel) decomposition --
    # z0[m] -> output row 2m, z1[m] -> output row 2m+1; the middle input slice
    # feeds both parities, so it is multiplied once by [W1|W2] (N = 2*nco).
    s0 = flat(xf[:, 0:h, :])
    s1 = flat(x_ref[...])                          # == xf[:, 1:h+1, :]
    s2 = flat(xf[:, 2:h + 2, :])
    zmid = mm(s1, wup_ref[:, nco:3 * nco])
    b_up = bias_ref[0:1, :]
    z0 = mm(s0, wup_ref[:, :nco]) + zmid[:, :nco] + b_up
    z1 = mm(s2, wup_ref[:, 3 * nco:]) + zmid[:, nco:] + b_up
    f1[:, 1:h + 1, 0:nco] = z0.astype(bf16).reshape(n, h, nco)
    f1[:, 1:h + 1, e:e + nco] = z1.astype(bf16).reshape(n, h, nco)

    # ---- conv1: 3x3 SAME over concat(up, skip) + ReLU, parity-split output ---
    # main term: one K=2E matmul producing both parities (N = 2*nco)
    c_mid = flat(f1[:, 1:h + 1, :])
    c1_both = mm(c_mid, w1m_ref[...])                       # [c1_e | c1_o]
    c1_e = c1_both[:, :nco] + mm(flat(f1[:, 0:h, e:]), w1h_ref[:, :nco])
    c1_o = c1_both[:, nco:] + mm(flat(f1[:, 2:h + 2, :e]), w1h_ref[:, nco:])
    b1 = bias_ref[1:2, :]
    f2[:, 1:h + 1, :nco] = jnp.maximum(c1_e + b1, 0.0).astype(bf16).reshape(
        n, h, nco)
    f2[:, 1:h + 1, nco:] = jnp.maximum(c1_o + b1, 0.0).astype(bf16).reshape(
        n, h, nco)

    # ---- conv2: 3x3 SAME + ReLU, parity-split output --------------------------
    d_mid = flat(f2[:, 1:h + 1, :])
    c2_both = mm(d_mid, w2m_ref[...])                       # [c2_e | c2_o]
    c2_e = c2_both[:, :nco] + mm(flat(f2[:, 0:h, nco:]), w2h_ref[:, :nco])
    c2_o = c2_both[:, nco:] + mm(flat(f2[:, 2:h + 2, :nco]), w2h_ref[:, nco:])
    b2 = bias_ref[2:3, :]
    o_e = jnp.maximum(c2_e + b2, 0.0).astype(o_ref.dtype)
    o_o = jnp.maximum(c2_o + b2, 0.0).astype(o_ref.dtype)
    # output lanes: [even-row plane | odd-row plane]; the final row interleave
    # is folded into the wrapper's output reshape/transpose (essentially free).
    o_ref[...] = jnp.concatenate([o_e, o_o], axis=-1).reshape(n, h, 2 * nco)


# --------------------- spread-weight builders (XLA glue) ---------------------
def _build_deconv_spread(w_pt, w_in):
    """ConvTranspose2d(k=4,s=2,p=1) spread weights.

    Returns (4, W*Cin, 2W*Cout), index = 2*r + d where r = output-row parity,
    d = which of the two input rows feeds that parity.  Input lane = iw*Cin+ci,
    output lane = ow*Cout+co; the stride-2 column scatter and SAME padding
    along W are baked in as zeros.
    """
    cin, cout, _, kw_sz = w_pt.shape
    w2 = 2 * w_in
    iw = jnp.arange(w_in)
    ow = jnp.arange(w2)
    kw = ow[None, :] - 2 * iw[:, None] + 1                     # (w_in, w2)
    valid = (kw >= 0) & (kw < kw_sz)
    kw_c = jnp.clip(kw, 0, kw_sz - 1)
    mats = []
    for r in range(2):
        for d in range(2):
            kh = 3 - r - 2 * d
            g = w_pt[:, :, kh, :][:, :, kw_c]                  # (cin,cout,w_in,w2)
            g = jnp.where(valid[None, None], g, 0.0)
            mats.append(jnp.transpose(g, (2, 0, 3, 1)).reshape(w_in * cin,
                                                               w2 * cout))
    return jnp.stack(mats)


def _build_conv3_spread(w_oihw, w_sp):
    """Conv2d 3x3 stride-1 SAME spread weights, (3, W*Cin, W*Cout), index = kh.

    SAME padding along W is baked in (out-of-range kw entries are zero); only
    the H padding is handled in-kernel with zero halo rows.
    """
    cout, cin, _, kw_sz = w_oihw.shape
    iw = jnp.arange(w_sp)
    ow = jnp.arange(w_sp)
    kw = iw[:, None] - ow[None, :] + 1                         # (w_sp, w_sp)
    valid = (kw >= 0) & (kw < kw_sz)
    kw_c = jnp.clip(kw, 0, kw_sz - 1)
    mats = []
    for kh in range(3):
        g = w_oihw[:, :, kh, :][:, :, kw_c]                    # (cout,cin,iw,ow)
        g = jnp.where(valid[None, None], g, 0.0)
        mats.append(jnp.transpose(g, (2, 1, 3, 0)).reshape(w_sp * cin,
                                                           w_sp * cout))
    return jnp.stack(mats)


# ------------------------------- forward pass --------------------------------
def unet_up_forward(params, inputs0_nchw, skip_nchw):
    """unetUp.forward with is_deconv=True, skip_connection=True, n_concat=2.

    Returns NCHW bf16 (the kernel's native output is a lane-dense
    (N, H, 2*2W*Cout) parity-split NHWC-row layout).
    """
    bf16 = jnp.bfloat16
    n, cin, h, w = inputs0_nchw.shape
    cout = params["up_b"].shape[0]
    cs = skip_nchw.shape[1]
    h2, w2 = 2 * h, 2 * w
    assert skip_nchw.shape == (n, cs, h2, w2)
    nco = w2 * cout                       # conv-stage lanes per parity plane
    ncs = w2 * cs
    e = nco + ncs                         # fused-concat lanes per parity plane

    # activations as lane-flattened rows (lane = iw*C + ci), bf16 MXU feed
    x_rows = jnp.transpose(inputs0_nchw, (0, 2, 3, 1)).reshape(n, h, w * cin)
    x_rows = x_rows.astype(bf16)
    s_rows = jnp.transpose(skip_nchw, (0, 2, 3, 1)).reshape(n, h2, ncs)
    ske = s_rows[:, 0::2, :].astype(bf16)          # even skip rows
    sko = s_rows[:, 1::2, :].astype(bf16)          # odd  skip rows

    def vstack(mats):
        return jnp.concatenate(mats, axis=0)

    # deconv spread weights packed as columns [W(r0,d0) | W(r0,d1) | W(r1,d0) | W(r1,d1)]
    wup4 = _build_deconv_spread(params["up_w"], w)             # (4, W*Cin, nco)
    wup = jnp.transpose(wup4, (1, 0, 2)).reshape(w * cin, 4 * nco).astype(bf16)

    # conv1 spread weights, concat + parity fused.
    # f1 lane order is [z0 | skip_e | z1 | skip_o].
    c1u = _build_conv3_spread(params["c1_w"][:, :cout], w2)    # up half
    c1s = _build_conv3_spread(params["c1_w"][:, cout:], w2)    # skip half
    wa = vstack([c1u[1], c1s[1], c1u[2], c1s[2]])              # even-out main
    wc = vstack([c1u[0], c1s[0], c1u[1], c1s[1]])              # odd-out  main
    w1_main = jnp.concatenate([wa, wc], axis=1).astype(bf16)   # (2E, 2*nco)
    wb = vstack([c1u[0], c1s[0]])                              # even-out halo
    wd = vstack([c1u[2], c1s[2]])                              # odd-out  halo
    w1_halo = jnp.concatenate([wb, wd], axis=1).astype(bf16)   # (E, 2*nco)

    # conv2 spread weights; f2 lane order is [c1_e | c1_o]
    c2sp = _build_conv3_spread(params["c2_w"], w2)
    w2_main = jnp.concatenate([vstack([c2sp[1], c2sp[2]]),
                               vstack([c2sp[0], c2sp[1]])], axis=1).astype(bf16)
    w2_halo = jnp.concatenate([c2sp[0], c2sp[2]], axis=1).astype(bf16)

    biases = jnp.stack([jnp.tile(params["up_b"], w2),
                        jnp.tile(params["c1_b"], w2),
                        jnp.tile(params["c2_b"], w2)]).astype(jnp.float32)

    out_rows = pl.pallas_call(
        _unet_up_kernel,
        out_shape=jax.ShapeDtypeStruct((n, h, 2 * nco), bf16),
        grid_spec=pltpu.PrefetchScalarGridSpec(
            num_scalar_prefetch=0,
            grid=(1,),                      # whole batch folded into matmul M
            in_specs=[
                pl.BlockSpec((n, h, w * cin), lambda i: (0, 0, 0)),
                pl.BlockSpec((n, h, ncs), lambda i: (0, 0, 0)),
                pl.BlockSpec((n, h, ncs), lambda i: (0, 0, 0)),
                pl.BlockSpec((w * cin, 4 * nco), lambda i: (0, 0)),
                pl.BlockSpec((2 * e, 2 * nco), lambda i: (0, 0)),
                pl.BlockSpec((e, 2 * nco), lambda i: (0, 0)),
                pl.BlockSpec((2 * nco, 2 * nco), lambda i: (0, 0)),
                pl.BlockSpec((nco, 2 * nco), lambda i: (0, 0)),
                pl.BlockSpec((3, nco), lambda i: (0, 0)),
            ],
            out_specs=pl.BlockSpec((n, h, 2 * nco), lambda i: (0, 0, 0)),
            scratch_shapes=[
                pltpu.VMEM((n, h + 2, w * cin), bf16),    # deconv input frame
                pltpu.VMEM((n, h + 2, 2 * e), bf16),      # conv1 input frame
                pltpu.VMEM((n, h + 2, 2 * nco), bf16),    # conv2 input frame
            ]),
        compiler_params=pltpu.CompilerParams(
            dimension_semantics=("arbitrary",)),
    )(x_rows, ske, sko, wup, w1_main, w1_halo, w2_main, w2_halo, biases)

    # (N, H, [parity, ow, co]) -> NCHW; the row interleave rides on the single
    # small transpose that NCHW consumers need anyway.
    out = out_rows.reshape(n, h, 2, w2, cout)
    out = jnp.transpose(out, (0, 4, 1, 2, 3)).reshape(n, cout, h2, w2)
    return out


# ------------------------------ init / reference -----------------------------
def init_params(key, in_size, out_size):
    """Deterministic kaiming-style init, PyTorch parameter layouts."""
    ks = jax.random.split(key, 6)

    def kaiming(k, shape, fan_in):
        return jax.random.normal(k, shape, jnp.float32) * np.sqrt(2.0 / fan_in)

    return {
        # ConvTranspose2d(in_size, out_size, 4, 2, 1): weight (Cin, Cout, 4, 4)
        "up_w": kaiming(ks[0], (in_size, out_size, 4, 4), in_size * 16),
        "up_b": 0.01 * jax.random.normal(ks[1], (out_size,), jnp.float32),
        # Conv2d(2*out_size, out_size, 3, 1, 1): weight (Cout, Cin, 3, 3)
        "c1_w": kaiming(ks[2], (out_size, 2 * out_size, 3, 3), 2 * out_size * 9),
        "c1_b": 0.01 * jax.random.normal(ks[3], (out_size,), jnp.float32),
        # Conv2d(out_size, out_size, 3, 1, 1)
        "c2_w": kaiming(ks[4], (out_size, out_size, 3, 3), out_size * 9),
        "c2_b": 0.01 * jax.random.normal(ks[5], (out_size,), jnp.float32),
    }


def _unet_up_reference(params, inputs0_nchw, skip_nchw):
    """Pure-JAX f32 reference (lax convs) to sanity-check the Pallas kernel."""
    dn = ("NHWC", "HWIO", "NHWC")
    x = jnp.transpose(inputs0_nchw, (0, 2, 3, 1)).astype(jnp.float32)
    sk = jnp.transpose(skip_nchw, (0, 2, 3, 1)).astype(jnp.float32)
    w_up = jnp.transpose(params["up_w"], (2, 3, 0, 1))[::-1, ::-1]
    up = jax.lax.conv_general_dilated(x, w_up, (1, 1), [(2, 2), (2, 2)],
                                      lhs_dilation=(2, 2),
                                      dimension_numbers=dn) + params["up_b"]
    y = jnp.concatenate([up, sk], axis=-1)
    w1 = jnp.transpose(params["c1_w"], (2, 3, 1, 0))
    y = jnp.maximum(jax.lax.conv_general_dilated(y, w1, (1, 1), [(1, 1), (1, 1)],
                                                 dimension_numbers=dn)
                    + params["c1_b"], 0.0)
    w2 = jnp.transpose(params["c2_w"], (2, 3, 1, 0))
    y = jnp.maximum(jax.lax.conv_general_dilated(y, w2, (1, 1), [(1, 1), (1, 1)],
                                                 dimension_numbers=dn)
                    + params["c2_b"], 0.0)
    return jnp.transpose(y, (0, 3, 1, 2))


# ----------------------------------- main -------------------------------------
if __name__ == "__main__":
    in_size, out_size = 16, 8
    n, h, w = 2, 8, 8                      # inputs0 spatial (upsampled to 16x16)

    key = jax.random.PRNGKey(0)
    k_p, k_x, k_s = jax.random.split(key, 3)
    params = init_params(k_p, in_size, out_size)

    inputs0 = jax.random.normal(k_x, (n, in_size, h, w), jnp.float32)        # NCHW
    skip = jax.random.normal(k_s, (n, out_size, 2 * h, 2 * w), jnp.float32)  # NCHW

    fwd = jax.jit(unet_up_forward)
    out = jax.block_until_ready(fwd(params, inputs0, skip))
    assert out.shape == (n, out_size, 2 * h, 2 * w), out.shape

    ref = jax.jit(_unet_up_reference)(params, inputs0, skip)
    # bf16 MXU operands / bf16 output with f32 accumulation -> loose tolerance
    np.testing.assert_allclose(np.asarray(out.astype(jnp.float32)),
                               np.asarray(ref), rtol=5e-2, atol=5e-2)

    print("KERNEL_OK")
</pallas_src>

<mosaic_0001>
module attributes {stable_mosaic.version = 11 : i64} {
  func.func @_unet_up_kernel(%arg0: i32, %arg1: memref<2x8x128xbf16, #tpu.memory_space<vmem>>, %arg2: memref<2x8x128xbf16, #tpu.memory_space<vmem>>, %arg3: memref<2x8x128xbf16, #tpu.memory_space<vmem>>, %arg4: memref<128x512xbf16, #tpu.memory_space<vmem>>, %arg5: memref<512x256xbf16, #tpu.memory_space<vmem>>, %arg6: memref<256x256xbf16, #tpu.memory_space<vmem>>, %arg7: memref<256x256xbf16, #tpu.memory_space<vmem>>, %arg8: memref<128x256xbf16, #tpu.memory_space<vmem>>, %arg9: memref<3x128xf32, #tpu.memory_space<vmem>>, %arg10: memref<2x8x256xbf16, #tpu.memory_space<vmem>>, %arg11: memref<2x10x128xbf16, #tpu.memory_space<vmem>>, %arg12: memref<2x10x512xbf16, #tpu.memory_space<vmem>>, %arg13: memref<2x10x256xbf16, #tpu.memory_space<vmem>>) attributes {dimension_semantics = [#tpu.dimension_semantics<arbitrary>], iteration_bounds = array<i64: 1>, scalar_prefetch = 0 : i64, scratch_operands = 3 : i64, tpu.core_type = #tpu.core_type<tc>, window_params = [{pipeline_mode = #tpu.pipeline_mode<synchronous>, transform_indices = @transform_0, window_bounds = array<i64: 2, 8, 128>}, {pipeline_mode = #tpu.pipeline_mode<synchronous>, transform_indices = @transform_1, window_bounds = array<i64: 2, 8, 128>}, {pipeline_mode = #tpu.pipeline_mode<synchronous>, transform_indices = @transform_2, window_bounds = array<i64: 2, 8, 128>}, {pipeline_mode = #tpu.pipeline_mode<synchronous>, transform_indices = @transform_3, window_bounds = array<i64: 128, 512>}, {pipeline_mode = #tpu.pipeline_mode<synchronous>, transform_indices = @transform_4, window_bounds = array<i64: 512, 256>}, {pipeline_mode = #tpu.pipeline_mode<synchronous>, transform_indices = @transform_5, window_bounds = array<i64: 256, 256>}, {pipeline_mode = #tpu.pipeline_mode<synchronous>, transform_indices = @transform_6, window_bounds = array<i64: 256, 256>}, {pipeline_mode = #tpu.pipeline_mode<synchronous>, transform_indices = @transform_7, window_bounds = array<i64: 128, 256>}, {pipeline_mode = #tpu.pipeline_mode<synchronous>, transform_indices = @transform_8, window_bounds = array<i64: 3, 128>}, {pipeline_mode = #tpu.pipeline_mode<synchronous>, transform_indices = @transform_9, window_bounds = array<i64: 2, 8, 256>}]} {
    %cst = arith.constant 0.000000e+00 : bf16
    %0 = vector.broadcast %cst : bf16 to vector<2x1x128xbf16>
    %c0 = arith.constant 0 : index
    %c0_0 = arith.constant 0 : index
    %c0_1 = arith.constant 0 : index
    %1 = vector.load %arg11[%c0, %c0_0, %c0_1] : memref<2x10x128xbf16, #tpu.memory_space<vmem>>, vector<2x1x128xbf16>
    tpu.vector_store %arg11[%c0, %c0_0, %c0_1], %0 {strides = array<i32>} : memref<2x10x128xbf16, #tpu.memory_space<vmem>>, vector<2x1x128xbf16>,
    %cst_2 = arith.constant 0.000000e+00 : bf16
    %2 = vector.broadcast %cst_2 : bf16 to vector<2x1x128xbf16>
    %c0_3 = arith.constant 0 : index
    %c9 = arith.constant 9 : index
    %c0_4 = arith.constant 0 : index
    %3 = vector.load %arg11[%c0_3, %c9, %c0_4] : memref<2x10x128xbf16, #tpu.memory_space<vmem>>, vector<2x1x128xbf16>
    tpu.vector_store %arg11[%c0_3, %c9, %c0_4], %2 {strides = array<i32>} : memref<2x10x128xbf16, #tpu.memory_space<vmem>>, vector<2x1x128xbf16>,
    %cst_5 = arith.constant 0.000000e+00 : bf16
    %4 = vector.broadcast %cst_5 : bf16 to vector<2x1x512xbf16>
    %c0_6 = arith.constant 0 : index
    %c0_7 = arith.constant 0 : index
    %c0_8 = arith.constant 0 : index
    %5 = vector.load %arg12[%c0_6, %c0_7, %c0_8] : memref<2x10x512xbf16, #tpu.memory_space<vmem>>, vector<2x1x512xbf16>
    tpu.vector_store %arg12[%c0_6, %c0_7, %c0_8], %4 {strides = array<i32>} : memref<2x10x512xbf16, #tpu.memory_space<vmem>>, vector<2x1x512xbf16>,
    %cst_9 = arith.constant 0.000000e+00 : bf16
    %6 = vector.broadcast %cst_9 : bf16 to vector<2x1x512xbf16>
    %c0_10 = arith.constant 0 : index
    %c9_11 = arith.constant 9 : index
    %c0_12 = arith.constant 0 : index
    %7 = vector.load %arg12[%c0_10, %c9_11, %c0_12] : memref<2x10x512xbf16, #tpu.memory_space<vmem>>, vector<2x1x512xbf16>
    tpu.vector_store %arg12[%c0_10, %c9_11, %c0_12], %6 {strides = array<i32>} : memref<2x10x512xbf16, #tpu.memory_space<vmem>>, vector<2x1x512xbf16>,
    %cst_13 = arith.constant 0.000000e+00 : bf16
    %8 = vector.broadcast %cst_13 : bf16 to vector<2x1x256xbf16>
    %c0_14 = arith.constant 0 : index
    %c0_15 = arith.constant 0 : index
    %c0_16 = arith.constant 0 : index
    %9 = vector.load %arg13[%c0_14, %c0_15, %c0_16] : memref<2x10x256xbf16, #tpu.memory_space<vmem>>, vector<2x1x256xbf16>
    tpu.vector_store %arg13[%c0_14, %c0_15, %c0_16], %8 {strides = array<i32>} : memref<2x10x256xbf16, #tpu.memory_space<vmem>>, vector<2x1x256xbf16>,
    %cst_17 = arith.constant 0.000000e+00 : bf16
    %10 = vector.broadcast %cst_17 : bf16 to vector<2x1x256xbf16>
    %c0_18 = arith.constant 0 : index
    %c9_19 = arith.constant 9 : index
    %c0_20 = arith.constant 0 : index
    %11 = vector.load %arg13[%c0_18, %c9_19, %c0_20] : memref<2x10x256xbf16, #tpu.memory_space<vmem>>, vector<2x1x256xbf16>
    tpu.vector_store %arg13[%c0_18, %c9_19, %c0_20], %10 {strides = array<i32>} : memref<2x10x256xbf16, #tpu.memory_space<vmem>>, vector<2x1x256xbf16>,
    %c0_21 = arith.constant 0 : index
    %c0_22 = arith.constant 0 : index
    %c0_23 = arith.constant 0 : index
    %12 = vector.load %arg1[%c0_21, %c0_22, %c0_23] : memref<2x8x128xbf16, #tpu.memory_space<vmem>>, vector<2x8x128xbf16>
    %c0_24 = arith.constant 0 : index
    %c1 = arith.constant 1 : index
    %c0_25 = arith.constant 0 : index
    %13 = vector.load %arg11[%c0_24, %c1, %c0_25] : memref<2x10x128xbf16, #tpu.memory_space<vmem>>, vector<2x8x128xbf16>
    tpu.vector_store %arg11[%c0_24, %c1, %c0_25], %12 {strides = array<i32>} : memref<2x10x128xbf16, #tpu.memory_space<vmem>>, vector<2x8x128xbf16>,
    %c0_26 = arith.constant 0 : index
    %c0_27 = arith.constant 0 : index
    %c0_28 = arith.constant 0 : index
    %14 = vector.load %arg2[%c0_26, %c0_27, %c0_28] : memref<2x8x128xbf16, #tpu.memory_space<vmem>>, vector<2x8x128xbf16>
    %c0_29 = arith.constant 0 : index
    %c1_30 = arith.constant 1 : index
    %c128 = arith.constant 128 : index
    %15 = vector.load %arg12[%c0_29, %c1_30, %c128] : memref<2x10x512xbf16, #tpu.memory_space<vmem>>, vector<2x8x128xbf16>
    tpu.vector_store %arg12[%c0_29, %c1_30, %c128], %14 {strides = array<i32>} : memref<2x10x512xbf16, #tpu.memory_space<vmem>>, vector<2x8x128xbf16>,
    %c0_31 = arith.constant 0 : index
    %c0_32 = arith.constant 0 : index
    %c0_33 = arith.constant 0 : index
    %16 = vector.load %arg3[%c0_31, %c0_32, %c0_33] : memref<2x8x128xbf16, #tpu.memory_space<vmem>>, vector<2x8x128xbf16>
    %c0_34 = arith.constant 0 : index
    %c1_35 = arith.constant 1 : index
    %c384 = arith.constant 384 : index
    %17 = vector.load %arg12[%c0_34, %c1_35, %c384] : memref<2x10x512xbf16, #tpu.memory_space<vmem>>, vector<2x8x128xbf16>
    tpu.vector_store %arg12[%c0_34, %c1_35, %c384], %16 {strides = array<i32>} : memref<2x10x512xbf16, #tpu.memory_space<vmem>>, vector<2x8x128xbf16>,
    %c0_36 = arith.constant 0 : index
    %c0_37 = arith.constant 0 : index
    %c0_38 = arith.constant 0 : index
    %18 = vector.load %arg11[%c0_36, %c0_37, %c0_38] : memref<2x10x128xbf16, #tpu.memory_space<vmem>>, vector<2x8x128xbf16>
    %19 = vector.shape_cast %18 : vector<2x8x128xbf16> to vector<16x128xbf16>
    %c0_39 = arith.constant 0 : index
    %c0_40 = arith.constant 0 : index
    %c0_41 = arith.constant 0 : index
    %20 = vector.load %arg1[%c0_39, %c0_40, %c0_41] : memref<2x8x128xbf16, #tpu.memory_space<vmem>>, vector<2x8x128xbf16>
    %21 = vector.shape_cast %20 : vector<2x8x128xbf16> to vector<16x128xbf16>
    %c0_42 = arith.constant 0 : index
    %c2 = arith.constant 2 : index
    %c0_43 = arith.constant 0 : index
    %22 = vector.load %arg11[%c0_42, %c2, %c0_43] : memref<2x10x128xbf16, #tpu.memory_space<vmem>>, vector<2x8x128xbf16>
    %23 = vector.shape_cast %22 : vector<2x8x128xbf16> to vector<16x128xbf16>
    %c0_44 = arith.constant 0 : index
    %c128_45 = arith.constant 128 : index
    %24 = vector.load %arg4[%c0_44, %c128_45] : memref<128x512xbf16, #tpu.memory_space<vmem>>, vector<128x256xbf16>
    %cst_46 = arith.constant dense<0.000000e+00> : vector<16x256xf32>
    %25 = tpu.matmul %21, %24, %cst_46 {dimension_numbers = #tpu.dot_dimension_numbers<[1], [0], [0], [1], [0, 0, 1, 1], [], []>} : vector<16x128xbf16>, vector<128x256xbf16>, vector<16x256xf32> -> vector<16x256xf32>
    %c0_47 = arith.constant 0 : index
    %c0_48 = arith.constant 0 : index
    %26 = vector.load %arg9[%c0_47, %c0_48] : memref<3x128xf32, #tpu.memory_space<vmem>>, vector<1x128xf32>
    %c0_49 = arith.constant 0 : index
    %c0_50 = arith.constant 0 : index
    %27 = vector.load %arg4[%c0_49, %c0_50] : memref<128x512xbf16, #tpu.memory_space<vmem>>, vector<128x128xbf16>
    %cst_51 = arith.constant dense<0.000000e+00> : vector<16x128xf32>
    %28 = tpu.matmul %19, %27, %cst_51 {dimension_numbers = #tpu.dot_dimension_numbers<[1], [0], [0], [1], [0, 0, 1, 1], [], []>} : vector<16x128xbf16>, vector<128x128xbf16>, vector<16x128xf32> -> vector<16x128xf32>
    %29 = vector.extract_strided_slice %25 {offsets = [0, 0], sizes = [16, 128], strides = [1, 1]} : vector<16x256xf32> to vector<16x128xf32>
    %30 = arith.addf %28, %29 : vector<16x128xf32>
    %31 = vector.broadcast %26 : vector<1x128xf32> to vector<16x128xf32>
    %32 = arith.addf %30, %31 : vector<16x128xf32>
    %c0_52 = arith.constant 0 : index
    %c384_53 = arith.constant 384 : index
    %33 = vector.load %arg4[%c0_52, %c384_53] : memref<128x512xbf16, #tpu.memory_space<vmem>>, vector<128x128xbf16>
    %cst_54 = arith.constant dense<0.000000e+00> : vector<16x128xf32>
    %34 = tpu.matmul %23, %33, %cst_54 {dimension_numbers = #tpu.dot_dimension_numbers<[1], [0], [0], [1], [0, 0, 1, 1], [], []>} : vector<16x128xbf16>, vector<128x128xbf16>, vector<16x128xf32> -> vector<16x128xf32>
    %35 = vector.extract_strided_slice %25 {offsets = [0, 128], sizes = [16, 128], strides = [1, 1]} : vector<16x256xf32> to vector<16x128xf32>
    %36 = arith.addf %34, %35 : vector<16x128xf32>
    %37 = vector.broadcast %26 : vector<1x128xf32> to vector<16x128xf32>
    %38 = arith.addf %36, %37 : vector<16x128xf32>
    %39 = arith.truncf %32 : vector<16x128xf32> to vector<16x128xbf16>
    %40 = vector.shape_cast %39 : vector<16x128xbf16> to vector<2x8x128xbf16>
    %c0_55 = arith.constant 0 : index
    %c1_56 = arith.constant 1 : index
    %c0_57 = arith.constant 0 : index
    %41 = vector.load %arg12[%c0_55, %c1_56, %c0_57] : memref<2x10x512xbf16, #tpu.memory_space<vmem>>, vector<2x8x128xbf16>
    tpu.vector_store %arg12[%c0_55, %c1_56, %c0_57], %40 {strides = array<i32>} : memref<2x10x512xbf16, #tpu.memory_space<vmem>>, vector<2x8x128xbf16>,
    %42 = arith.truncf %38 : vector<16x128xf32> to vector<16x128xbf16>
    %43 = vector.shape_cast %42 : vector<16x128xbf16> to vector<2x8x128xbf16>
    %c0_58 = arith.constant 0 : index
    %c1_59 = arith.constant 1 : index
    %c256 = arith.constant 256 : index
    %44 = vector.load %arg12[%c0_58, %c1_59, %c256] : memref<2x10x512xbf16, #tpu.memory_space<vmem>>, vector<2x8x128xbf16>
    tpu.vector_store %arg12[%c0_58, %c1_59, %c256], %43 {strides = array<i32>} : memref<2x10x512xbf16, #tpu.memory_space<vmem>>, vector<2x8x128xbf16>,
    %c0_60 = arith.constant 0 : index
    %c1_61 = arith.constant 1 : index
    %c0_62 = arith.constant 0 : index
    %45 = vector.load %arg12[%c0_60, %c1_61, %c0_62] : memref<2x10x512xbf16, #tpu.memory_space<vmem>>, vector<2x8x512xbf16>
    %46 = vector.shape_cast %45 : vector<2x8x512xbf16> to vector<16x512xbf16>
    %c0_63 = arith.constant 0 : index
    %c0_64 = arith.constant 0 : index
    %47 = vector.load %arg5[%c0_63, %c0_64] : memref<512x256xbf16, #tpu.memory_space<vmem>>, vector<512x256xbf16>
    %cst_65 = arith.constant dense<0.000000e+00> : vector<16x256xf32>
    %48 = tpu.matmul %46, %47, %cst_65 {dimension_numbers = #tpu.dot_dimension_numbers<[1], [0], [0], [1], [0, 0, 1, 1], [], []>} : vector<16x512xbf16>, vector<512x256xbf16>, vector<16x256xf32> -> vector<16x256xf32>
    %49 = vector.extract_strided_slice %48 {offsets = [0, 0], sizes = [16, 128], strides = [1, 1]} : vector<16x256xf32> to vector<16x128xf32>
    %c0_66 = arith.constant 0 : index
    %c0_67 = arith.constant 0 : index
    %c256_68 = arith.constant 256 : index
    %50 = vector.load %arg12[%c0_66, %c0_67, %c256_68] : memref<2x10x512xbf16, #tpu.memory_space<vmem>>, vector<2x8x256xbf16>
    %51 = vector.shape_cast %50 : vector<2x8x256xbf16> to vector<16x256xbf16>
    %c0_69 = arith.constant 0 : index
    %c0_70 = arith.constant 0 : index
    %52 = vector.load %arg6[%c0_69, %c0_70] : memref<256x256xbf16, #tpu.memory_space<vmem>>, vector<256x128xbf16>
    %cst_71 = arith.constant dense<0.000000e+00> : vector<16x128xf32>
    %53 = tpu.matmul %51, %52, %cst_71 {dimension_numbers = #tpu.dot_dimension_numbers<[1], [0], [0], [1], [0, 0, 1, 1], [], []>} : vector<16x256xbf16>, vector<256x128xbf16>, vector<16x128xf32> -> vector<16x128xf32>
    %54 = arith.addf %49, %53 : vector<16x128xf32>
    %55 = vector.extract_strided_slice %48 {offsets = [0, 128], sizes = [16, 128], strides = [1, 1]} : vector<16x256xf32> to vector<16x128xf32>
    %c0_72 = arith.constant 0 : index
    %c2_73 = arith.constant 2 : index
    %c0_74 = arith.constant 0 : index
    %56 = vector.load %arg12[%c0_72, %c2_73, %c0_74] : memref<2x10x512xbf16, #tpu.memory_space<vmem>>, vector<2x8x256xbf16>
    %57 = vector.shape_cast %56 : vector<2x8x256xbf16> to vector<16x256xbf16>
    %c0_75 = arith.constant 0 : index
    %c128_76 = arith.constant 128 : index
    %58 = vector.load %arg6[%c0_75, %c128_76] : memref<256x256xbf16, #tpu.memory_space<vmem>>, vector<256x128xbf16>
    %cst_77 = arith.constant dense<0.000000e+00> : vector<16x128xf32>
    %59 = tpu.matmul %57, %58, %cst_77 {dimension_numbers = #tpu.dot_dimension_numbers<[1], [0], [0], [1], [0, 0, 1, 1], [], []>} : vector<16x256xbf16>, vector<256x128xbf16>, vector<16x128xf32> -> vector<16x128xf32>
    %60 = arith.addf %55, %59 : vector<16x128xf32>
    %c1_78 = arith.constant 1 : index
    %c0_79 = arith.constant 0 : index
    %61 = vector.load %arg9[%c1_78, %c0_79] : memref<3x128xf32, #tpu.memory_space<vmem>>, vector<1x128xf32>
    %62 = vector.broadcast %61 : vector<1x128xf32> to vector<16x128xf32>
    %63 = arith.addf %54, %62 : vector<16x128xf32>
    %cst_80 = arith.constant 0.000000e+00 : f32
    %64 = vector.broadcast %cst_80 : f32 to vector<16x128xf32>
    %65 = arith.maximumf %63, %64 : vector<16x128xf32>
    %66 = arith.truncf %65 : vector<16x128xf32> to vector<16x128xbf16>
    %67 = vector.shape_cast %66 : vector<16x128xbf16> to vector<2x8x128xbf16>
    %c0_81 = arith.constant 0 : index
    %c1_82 = arith.constant 1 : index
    %c0_83 = arith.constant 0 : index
    %68 = vector.load %arg13[%c0_81, %c1_82, %c0_83] : memref<2x10x256xbf16, #tpu.memory_space<vmem>>, vector<2x8x128xbf16>
    tpu.vector_store %arg13[%c0_81, %c1_82, %c0_83], %67 {strides = array<i32>} : memref<2x10x256xbf16, #tpu.memory_space<vmem>>, vector<2x8x128xbf16>,
    %69 = vector.broadcast %61 : vector<1x128xf32> to vector<16x128xf32>
    %70 = arith.addf %60, %69 : vector<16x128xf32>
    %cst_84 = arith.constant 0.000000e+00 : f32
    %71 = vector.broadcast %cst_84 : f32 to vector<16x128xf32>
    %72 = arith.maximumf %70, %71 : vector<16x128xf32>
    %73 = arith.truncf %72 : vector<16x128xf32> to vector<16x128xbf16>
    %74 = vector.shape_cast %73 : vector<16x128xbf16> to vector<2x8x128xbf16>
    %c0_85 = arith.constant 0 : index
    %c1_86 = arith.constant 1 : index
    %c128_87 = arith.constant 128 : index
    %75 = vector.load %arg13[%c0_85, %c1_86, %c128_87] : memref<2x10x256xbf16, #tpu.memory_space<vmem>>, vector<2x8x128xbf16>
    tpu.vector_store %arg13[%c0_85, %c1_86, %c128_87], %74 {strides = array<i32>} : memref<2x10x256xbf16, #tpu.memory_space<vmem>>, vector<2x8x128xbf16>,
    %c0_88 = arith.constant 0 : index
    %c1_89 = arith.constant 1 : index
    %c0_90 = arith.constant 0 : index
    %76 = vector.load %arg13[%c0_88, %c1_89, %c0_90] : memref<2x10x256xbf16, #tpu.memory_space<vmem>>, vector<2x8x256xbf16>
    %77 = vector.shape_cast %76 : vector<2x8x256xbf16> to vector<16x256xbf16>
    %c0_91 = arith.constant 0 : index
    %c0_92 = arith.constant 0 : index
    %78 = vector.load %arg7[%c0_91, %c0_92] : memref<256x256xbf16, #tpu.memory_space<vmem>>, vector<256x256xbf16>
    %cst_93 = arith.constant dense<0.000000e+00> : vector<16x256xf32>
    %79 = tpu.matmul %77, %78, %cst_93 {dimension_numbers = #tpu.dot_dimension_numbers<[1], [0], [0], [1], [0, 0, 1, 1], [], []>} : vector<16x256xbf16>, vector<256x256xbf16>, vector<16x256xf32> -> vector<16x256xf32>
    %80 = vector.extract_strided_slice %79 {offsets = [0, 0], sizes = [16, 128], strides = [1, 1]} : vector<16x256xf32> to vector<16x128xf32>
    %c0_94 = arith.constant 0 : index
    %c0_95 = arith.constant 0 : index
    %c128_96 = arith.constant 128 : index
    %81 = vector.load %arg13[%c0_94, %c0_95, %c128_96] : memref<2x10x256xbf16, #tpu.memory_space<vmem>>, vector<2x8x128xbf16>
    %82 = vector.shape_cast %81 : vector<2x8x128xbf16> to vector<16x128xbf16>
    %c0_97 = arith.constant 0 : index
    %c0_98 = arith.constant 0 : index
    %83 = vector.load %arg8[%c0_97, %c0_98] : memref<128x256xbf16, #tpu.memory_space<vmem>>, vector<128x128xbf16>
    %cst_99 = arith.constant dense<0.000000e+00> : vector<16x128xf32>
    %84 = tpu.matmul %82, %83, %cst_99 {dimension_numbers = #tpu.dot_dimension_numbers<[1], [0], [0], [1], [0, 0, 1, 1], [], []>} : vector<16x128xbf16>, vector<128x128xbf16>, vector<16x128xf32> -> vector<16x128xf32>
    %85 = arith.addf %80, %84 : vector<16x128xf32>
    %86 = vector.extract_strided_slice %79 {offsets = [0, 128], sizes = [16, 128], strides = [1, 1]} : vector<16x256xf32> to vector<16x128xf32>
    %c0_100 = arith.constant 0 : index
    %c2_101 = arith.constant 2 : index
    %c0_102 = arith.constant 0 : index
    %87 = vector.load %arg13[%c0_100, %c2_101, %c0_102] : memref<2x10x256xbf16, #tpu.memory_space<vmem>>, vector<2x8x128xbf16>
    %88 = vector.shape_cast %87 : vector<2x8x128xbf16> to vector<16x128xbf16>
    %c0_103 = arith.constant 0 : index
    %c128_104 = arith.constant 128 : index
    %89 = vector.load %arg8[%c0_103, %c128_104] : memref<128x256xbf16, #tpu.memory_space<vmem>>, vector<128x128xbf16>
    %cst_105 = arith.constant dense<0.000000e+00> : vector<16x128xf32>
    %90 = tpu.matmul %88, %89, %cst_105 {dimension_numbers = #tpu.dot_dimension_numbers<[1], [0], [0], [1], [0, 0, 1, 1], [], []>} : vector<16x128xbf16>, vector<128x128xbf16>, vector<16x128xf32> -> vector<16x128xf32>
    %91 = arith.addf %86, %90 : vector<16x128xf32>
    %c2_106 = arith.constant 2 : index
    %c0_107 = arith.constant 0 : index
    %92 = vector.load %arg9[%c2_106, %c0_107] : memref<3x128xf32, #tpu.memory_space<vmem>>, vector<1x128xf32>
    %93 = vector.broadcast %92 : vector<1x128xf32> to vector<16x128xf32>
    %94 = arith.addf %85, %93 : vector<16x128xf32>
    %cst_108 = arith.constant 0.000000e+00 : f32
    %95 = vector.broadcast %cst_108 : f32 to vector<16x128xf32>
    %96 = arith.maximumf %94, %95 : vector<16x128xf32>
    %97 = arith.truncf %96 : vector<16x128xf32> to vector<16x128xbf16>
    %98 = vector.broadcast %92 : vector<1x128xf32> to vector<16x128xf32>
    %99 = arith.addf %91, %98 : vector<16x128xf32>
    %cst_109 = arith.constant 0.000000e+00 : f32
    %100 = vector.broadcast %cst_109 : f32 to vector<16x128xf32>
    %101 = arith.maximumf %99, %100 : vector<16x128xf32>
    %102 = arith.truncf %101 : vector<16x128xf32> to vector<16x128xbf16>
    %103 = tpu.concatenate %97, %102 in 1 : vector<16x128xbf16>, vector<16x128xbf16> -> vector<16x256xbf16>
    %104 = vector.shape_cast %103 : vector<16x256xbf16> to vector<2x8x256xbf16>
    %c0_110 = arith.constant 0 : index
    %c0_111 = arith.constant 0 : index
    %c0_112 = arith.constant 0 : index
    %105 = vector.load %arg10[%c0_110, %c0_111, %c0_112] : memref<2x8x256xbf16, #tpu.memory_space<vmem>>, vector<2x8x256xbf16>
    tpu.vector_store %arg10[%c0_110, %c0_111, %c0_112], %104 {strides = array<i32>} : memref<2x8x256xbf16, #tpu.memory_space<vmem>>, vector<2x8x256xbf16>,
    return
  }
  func.func @transform_0(%arg0: i32) -> (i32, i32, i32) {
    %c0_i32 = arith.constant 0 : i32
    %c0_i32_0 = arith.constant 0 : i32
    %c0_i32_1 = arith.constant 0 : i32
    %c0_i32_2 = arith.constant 0 : i32
    return %c0_i32, %c0_i32_0, %c0_i32_1 : i32, i32, i32
  }
  func.func @transform_1(%arg0: i32) -> (i32, i32, i32) {
    %c0_i32 = arith.constant 0 : i32
    %c0_i32_0 = arith.constant 0 : i32
    %c0_i32_1 = arith.constant 0 : i32
    %c0_i32_2 = arith.constant 0 : i32
    return %c0_i32, %c0_i32_0, %c0_i32_1 : i32, i32, i32
  }
  func.func @transform_2(%arg0: i32) -> (i32, i32, i32) {
    %c0_i32 = arith.constant 0 : i32
    %c0_i32_0 = arith.constant 0 : i32
    %c0_i32_1 = arith.constant 0 : i32
    %c0_i32_2 = arith.constant 0 : i32
    return %c0_i32, %c0_i32_0, %c0_i32_1 : i32, i32, i32
  }
  func.func @transform_3(%arg0: i32) -> (i32, i32) {
    %c0_i32 = arith.constant 0 : i32
    %c0_i32_0 = arith.constant 0 : i32
    %c0_i32_1 = arith.constant 0 : i32
    return %c0_i32, %c0_i32_0 : i32, i32
  }
  func.func @transform_4(%arg0: i32) -> (i32, i32) {
    %c0_i32 = arith.constant 0 : i32
    %c0_i32_0 = arith.constant 0 : i32
    %c0_i32_1 = arith.constant 0 : i32
    return %c0_i32, %c0_i32_0 : i32, i32
  }
  func.func @transform_5(%arg0: i32) -> (i32, i32) {
    %c0_i32 = arith.constant 0 : i32
    %c0_i32_0 = arith.constant 0 : i32
    %c0_i32_1 = arith.constant 0 : i32
    return %c0_i32, %c0_i32_0 : i32, i32
  }
  func.func @transform_6(%arg0: i32) -> (i32, i32) {
    %c0_i32 = arith.constant 0 : i32
    %c0_i32_0 = arith.constant 0 : i32
    %c0_i32_1 = arith.constant 0 : i32
    return %c0_i32, %c0_i32_0 : i32, i32
  }
  func.func @transform_7(%arg0: i32) -> (i32, i32) {
    %c0_i32 = arith.constant 0 : i32
    %c0_i32_0 = arith.constant 0 : i32
    %c0_i32_1 = arith.constant 0 : i32
    return %c0_i32, %c0_i32_0 : i32, i32
  }
  func.func @transform_8(%arg0: i32) -> (i32, i32) {
    %c0_i32 = arith.constant 0 : i32
    %c0_i32_0 = arith.constant 0 : i32
    %c0_i32_1 = arith.constant 0 : i32
    return %c0_i32, %c0_i32_0 : i32, i32
  }
  func.func @transform_9(%arg0: i32) -> (i32, i32, i32) {
    %c0_i32 = arith.constant 0 : i32
    %c0_i32_0 = arith.constant 0 : i32
    %c0_i32_1 = arith.constant 0 : i32
    %c0_i32_2 = arith.constant 0 : i32
    return %c0_i32, %c0_i32_0, %c0_i32_1 : i32, i32, i32
  }
}

</mosaic_0001>

<llo_original>
// kernel: tile.18
$region0: #{tile.18}
  #allocation0 [shape = 's32[1]{0}', space=sflag, size = 0x4, scoped, tag = 'scoped memory for tile.18']
  %s0 = inlined_call_operand.vmem [shape: f32[8], index: 0, kind: input, shape index: {}]
  %s1 = inlined_call_operand.vmem [shape: f32[16,8], index: 1, kind: output, shape index: {}]
  // Predicated region
  $region2: #{tile.18} parent=0 // pred_check
    _
  $region3: #{tile.18} parent=0 // pred_check_branch
    %3 = sbr.rel (0) target = $region5
  $region4: #{tile.18} parent=0 // pred_region
    _
  $region5: #{tile.18} parent=0 // pred_fallthru
    _
  %v4 = vld [vmem:[%s0] ss:$0 sm:$0xff]
  %5 = vst [vmem:[%s1] sm:$0xff] %v4
  %s6 = scalar_lea.vmem %s1, 8
  %7 = vst [vmem:[%s6] sm:$0xff] %v4

// kernel: tile.27
$region0: #{tile.27}
  %s0 = inlined_call_operand.vmem [shape: f32[16,8], index: 0, kind: input, shape index: {}]
  %s1 = inlined_call_operand.vmem [shape: f32[1,128], index: 1, kind: output, shape index: {}]
  $region1: #{tile.27} parent=0
    #allocation0 [shape = 'u8[4096]{0}', space=vmem, size = 0x1000, scoped, tag = 'scoped mem for output reshape']
    %v2 = vld [vmem:[%s0] sm:$0x1]
    %vm3 = vcmask 64512
    %4 = vst.msk [vmem:[#allocation0] sm:$0x1] %vm3, %v2
    %s5 = scalar_lea.vmem %s0, 15
    %v6 = vld [vmem:[%s5] sm:$0x1]
    %7 = vrot.lane.b32.xlu0 %v6, 120
    %v8 = vpop.permute.xlu0 %7
    %vm9 = vcmask 1048512
    %10 = vst.msk [vmem:[#allocation0] sm:$0x1] %vm9, %v8
    %s11 = scalar_lea.vmem %s0, 14
    %v12 = vld [vmem:[%s11] sm:$0x1]
    %13 = vrot.lane.b32.xlu0 %v12, 112
    %v14 = vpop.permute.xlu0 %13
    %vm15 = vcmask 982912
    %16 = vst.msk [vmem:[#allocation0] sm:$0x1] %vm15, %v14
    %s17 = scalar_lea.vmem %s0, 13
    %v18 = vld [vmem:[%s17] sm:$0x1]
    %19 = vrot.lane.b32.xlu0 %v18, 104
    %v20 = vpop.permute.xlu0 %19
    %vm21 = vcmask 917312
    %22 = vst.msk [vmem:[#allocation0] sm:$0x1] %vm21, %v20
    %s23 = scalar_lea.vmem %s0, 12
    %v24 = vld [vmem:[%s23] sm:$0x1]
    %25 = vrot.lane.b32.xlu0 %v24, 96
    %v26 = vpop.permute.xlu0 %25
    %vm27 = vcmask 851712
    %28 = vst.msk [vmem:[#allocation0] sm:$0x1] %vm27, %v26
    %s29 = scalar_lea.vmem %s0, 11
    %v30 = vld [vmem:[%s29] sm:$0x1]
    %31 = vrot.lane.b32.xlu0 %v30, 88
    %v32 = vpop.permute.xlu0 %31
    %vm33 = vcmask 786112
    %34 = vst.msk [vmem:[#allocation0] sm:$0x1] %vm33, %v32
    %s35 = scalar_lea.vmem %s0, 10
    %v36 = vld [vmem:[%s35] sm:$0x1]
    %37 = vrot.lane.b32.xlu0 %v36, 80
    %v38 = vpop.permute.xlu0 %37
    %vm39 = vcmask 720512
    %40 = vst.msk [vmem:[#allocation0] sm:$0x1] %vm39, %v38
    %s41 = scalar_lea.vmem %s0, 9
    %v42 = vld [vmem:[%s41] sm:$0x1]
    %43 = vrot.lane.b32.xlu0 %v42, 72
    %v44 = vpop.permute.xlu0 %43
    %vm45 = vcmask 654912
    %46 = vst.msk [vmem:[#allocation0] sm:$0x1] %vm45, %v44
    %s47 = scalar_lea.vmem %s0, 8
    %v48 = vld [vmem:[%s47] sm:$0x1]
    %49 = vrot.lane.b32.xlu0 %v48, 64
    %v50 = vpop.permute.xlu0 %49
    %vm51 = vcmask 589312
    %52 = vst.msk [vmem:[#allocation0] sm:$0x1] %vm51, %v50
    %s53 = scalar_lea.vmem %s0, 7
    %v54 = vld [vmem:[%s53] sm:$0x1]
    %55 = vrot.lane.b32.xlu0 %v54, 56
    %v56 = vpop.permute.xlu0 %55
    %vm57 = vcmask 523712
    %58 = vst.msk [vmem:[#allocation0] sm:$0x1] %vm57, %v56
    %s59 = scalar_lea.vmem %s0, 6
    %v60 = vld [vmem:[%s59] sm:$0x1]
    %61 = vrot.lane.b32.xlu0 %v60, 48
    %v62 = vpop.permute.xlu0 %61
    %vm63 = vcmask 458112
    %64 = vst.msk [vmem:[#allocation0] sm:$0x1] %vm63, %v62
    %s65 = scalar_lea.vmem %s0, 5
    %v66 = vld [vmem:[%s65] sm:$0x1]
    %67 = vrot.lane.b32.xlu0 %v66, 40
    %v68 = vpop.permute.xlu0 %67
    %vm69 = vcmask 392512
    %70 = vst.msk [vmem:[#allocation0] sm:$0x1] %vm69, %v68
    %s71 = scalar_lea.vmem %s0, 4
    %v72 = vld [vmem:[%s71] sm:$0x1]
    %73 = vrot.lane.b32.xlu0 %v72, 32
    %v74 = vpop.permute.xlu0 %73
    %vm75 = vcmask 326912
    %76 = vst.msk [vmem:[#allocation0] sm:$0x1] %vm75, %v74
    %s77 = scalar_lea.vmem %s0, 3
    %v78 = vld [vmem:[%s77] sm:$0x1]
    %79 = vrot.lane.b32.xlu0 %v78, 24
    %v80 = vpop.permute.xlu0 %79
    %vm81 = vcmask 261312
    %82 = vst.msk [vmem:[#allocation0] sm:$0x1] %vm81, %v80
    %s83 = scalar_lea.vmem %s0, 2
    %v84 = vld [vmem:[%s83] sm:$0x1]
    %85 = vrot.lane.b32.xlu0 %v84, 16
    %v86 = vpop.permute.xlu0 %85
    %vm87 = vcmask 195712
    %88 = vst.msk [vmem:[#allocation0] sm:$0x1] %vm87, %v86
    %s89 = scalar_lea.vmem %s0, 1
    %v90 = vld [vmem:[%s89] sm:$0x1]
    %91 = vrot.lane.b32.xlu0 %v90, 8
    %v92 = vpop.permute.xlu0 %91
    %vm93 = vcmask 130112
    %94 = vst.msk [vmem:[#allocation0] sm:$0x1] %vm93, %v92
    %s96 = sshll.u32 1, 1
    %s97 = ssub.s32 %s96, 1
    %v99 = vld [vmem:[#allocation0] sm:%s97]
    %s100 = sshll.u32 1, 1
    %s101 = ssub.s32 %s100, 1
    %102 = vst [vmem:[%s1] sm:%s101] %v99

// kernel: unet_up_forward.1
$region0: #{unet_up_forward.1}
  #allocation0 [shape = 'u32[]', space=smem, size = 0x4, offset = 0x4, fixed_abs, tag = 'smem constant byte address 0x4 - core index']
  #allocation1 [shape = 'u32[144,128]{1,0:T(1,128)}', space=vmem, size = 0x12000, scoped, tag = 'internal scratch']
  #allocation2 [shape = 'bf16[2,10,128]{2,1,0:T(8,128)(2,1)}', space=vmem, size = 0x2000, scoped, tag = 'scratch operand']
  #allocation3 [shape = 'bf16[2,10,512]{2,1,0:T(8,128)(2,1)}', space=vmem, size = 0x8000, scoped, tag = 'scratch operand']
  #allocation4 [shape = 'bf16[2,10,256]{2,1,0:T(8,128)(2,1)}', space=vmem, size = 0x4000, scoped, tag = 'scratch operand']
  %s0 = inlined_call_operand.vmem [shape: bf16[2,8,128], index: 0, kind: input, shape index: {}]
  %s1 = inlined_call_operand.vmem [shape: bf16[2,8,128], index: 1, kind: input, shape index: {}]
  %s2 = inlined_call_operand.vmem [shape: bf16[2,8,128], index: 2, kind: input, shape index: {}]
  %s3 = inlined_call_operand.vmem [shape: bf16[128,512], index: 3, kind: input, shape index: {}]
  %s4 = inlined_call_operand.vmem [shape: bf16[512,256], index: 4, kind: input, shape index: {}]
  %s5 = inlined_call_operand.vmem [shape: bf16[256,256], index: 5, kind: input, shape index: {}]
  %s6 = inlined_call_operand.vmem [shape: bf16[256,256], index: 6, kind: input, shape index: {}]
  %s7 = inlined_call_operand.vmem [shape: bf16[128,256], index: 7, kind: input, shape index: {}]
  %s8 = inlined_call_operand.vmem [shape: f32[3,128], index: 8, kind: input, shape index: {}]
  %s9 = inlined_call_operand.vmem [shape: bf16[2,8,256], index: 9, kind: output, shape index: {}]
  %s10 = sld [smem:[#allocation0]]
  $region46: #{unet_up_forward.1} parent=0
    _
  %s12 = ssub.s32 1, %s10
  %s13 = scalar_select 0, %s12, %s10
  // Predicated region
  $region2: #{unet_up_forward.1} parent=0 // pred_check
    _
  $region3: #{unet_up_forward.1} parent=0 // pred_check_branch
    %15 = sbr.rel (0) target = $region5
  $region4: #{unet_up_forward.1} parent=0 // pred_region
    _
  $region5: #{unet_up_forward.1} parent=0 // pred_fallthru
    _
  // Predicated region
  $region6: #{unet_up_forward.1} parent=0 // pred_check
    _
  $region7: #{unet_up_forward.1} parent=0 // pred_check_branch
    %17 = sbr.rel (0) target = $region9
  $region8: #{unet_up_forward.1} parent=0 // pred_region
    _
  $region9: #{unet_up_forward.1} parent=0 // pred_fallthru
    _
  // Predicated region
  $region10: #{unet_up_forward.1} parent=0 // pred_check
    _
  $region11: #{unet_up_forward.1} parent=0 // pred_check_branch
    %19 = sbr.rel (0) target = $region13
  $region12: #{unet_up_forward.1} parent=0 // pred_region
    _
  $region13: #{unet_up_forward.1} parent=0 // pred_fallthru
    _
  // Predicated region
  $region14: #{unet_up_forward.1} parent=0 // pred_check
    _
  $region15: #{unet_up_forward.1} parent=0 // pred_check_branch
    %21 = sbr.rel (0) target = $region17
  $region16: #{unet_up_forward.1} parent=0 // pred_region
    _
  $region17: #{unet_up_forward.1} parent=0 // pred_fallthru
    _
  // Predicated region
  $region18: #{unet_up_forward.1} parent=0 // pred_check
    _
  $region19: #{unet_up_forward.1} parent=0 // pred_check_branch
    %23 = sbr.rel (0) target = $region21
  $region20: #{unet_up_forward.1} parent=0 // pred_region
    _
  $region21: #{unet_up_forward.1} parent=0 // pred_fallthru
    _
  // Predicated region
  $region22: #{unet_up_forward.1} parent=0 // pred_check
    _
  $region23: #{unet_up_forward.1} parent=0 // pred_check_branch
    %25 = sbr.rel (0) target = $region25
  $region24: #{unet_up_forward.1} parent=0 // pred_region
    _
  $region25: #{unet_up_forward.1} parent=0 // pred_fallthru
    _
  // Predicated region
  $region26: #{unet_up_forward.1} parent=0 // pred_check
    _
  $region27: #{unet_up_forward.1} parent=0 // pred_check_branch
    %27 = sbr.rel (0) target = $region29
  $region28: #{unet_up_forward.1} parent=0 // pred_region
    _
  $region29: #{unet_up_forward.1} parent=0 // pred_fallthru
    _
  // Predicated region
  $region30: #{unet_up_forward.1} parent=0 // pred_check
    _
  $region31: #{unet_up_forward.1} parent=0 // pred_check_branch
    %29 = sbr.rel (0) target = $region33
  $region32: #{unet_up_forward.1} parent=0 // pred_region
    _
  $region33: #{unet_up_forward.1} parent=0 // pred_fallthru
    _
  // Predicated region
  $region34: #{unet_up_forward.1} parent=0 // pred_check
    _
  $region35: #{unet_up_forward.1} parent=0 // pred_check_branch
    %31 = sbr.rel (0) target = $region37
  $region36: #{unet_up_forward.1} parent=0 // pred_region
    _
  $region37: #{unet_up_forward.1} parent=0 // pred_fallthru
    _
  %vm33 = vcmask 1040384
  %vm34 = vsmask.f32 256
  %vm35 = vmand %vm33, %vm34
  %v36 = vld [vmem:[#allocation2] sm:$0x1]
  %v37 = vsel %vm35, 0, %v36
  %38 = vst [vmem:[#allocation2] sm:$0x1] %v37
  %v39 = vld [vmem:[#allocation2 + $0x8] sm:$0x1]
  %v40 = vsel %vm35, 0, %v39
  %41 = vst [vmem:[#allocation2 + $0x8] sm:$0x1] %v40
  %vm42 = vsmask.f32 7938
  %vm43 = vmand %vm33, %vm42
  %v44 = vld [vmem:[#allocation2 + $0x4] sm:$0x1]
  %v45 = vsel %vm43, 0, %v44
  %46 = vst [vmem:[#allocation2 + $0x4] sm:$0x1] %v45
  %v47 = vld [vmem:[#allocation2 + $0xc] sm:$0x1]
  %v48 = vsel %vm43, 0, %v47
  %49 = vst [vmem:[#allocation2 + $0xc] sm:$0x1] %v48
  %vm50 = vcmask 1044484
  %vm51 = vsmask.f32 4352
  %vm52 = vmand %vm50, %vm51
  %vm53 = vmor %vm52, %vm35
  %v54 = vld [vmem:[#allocation3] sm:$0x11]
  %v55 = vsel %vm53, 0, %v54
  %56 = vst [vmem:[#allocation3] sm:$0x11] %v55
  %v57 = vld [vmem:[#allocation3 + $0x8] sm:$0x11]
  %v58 = vsel %vm53, 0, %v57
  %59 = vst [vmem:[#allocation3 + $0x8] sm:$0x11] %v58
  %v60 = vld [vmem:[#allocation3 + $0x20] sm:$0x11]
  %v61 = vsel %vm53, 0, %v60
  %62 = vst [vmem:[#allocation3 + $0x20] sm:$0x11] %v61
  %v63 = vld [vmem:[#allocation3 + $0x28] sm:$0x11]
  %v64 = vsel %vm53, 0, %v63
  %65 = vst [vmem:[#allocation3 + $0x28] sm:$0x11] %v64
  %vm66 = vsmask.f32 7954
  %vm67 = vmand %vm50, %vm66
  %vm68 = vmor %vm67, %vm43
  %v69 = vld [vmem:[#allocation3 + $0x10] sm:$0x11]
  %v70 = vsel %vm68, 0, %v69
  %71 = vst [vmem:[#allocation3 + $0x10] sm:$0x11] %v70
  %v72 = vld [vmem:[#allocation3 + $0x18] sm:$0x11]
  %v73 = vsel %vm68, 0, %v72
  %74 = vst [vmem:[#allocation3 + $0x18] sm:$0x11] %v73
  %v75 = vld [vmem:[#allocation3 + $0x30] sm:$0x11]
  %v76 = vsel %vm68, 0, %v75
  %77 = vst [vmem:[#allocation3 + $0x30] sm:$0x11] %v76
  %v78 = vld [vmem:[#allocation3 + $0x38] sm:$0x11]
  %v79 = vsel %vm68, 0, %v78
  %80 = vst [vmem:[#allocation3 + $0x38] sm:$0x11] %v79
  %v81 = vld [vmem:[#allocation4] sm:$0x11]
  %v82 = vsel %vm53, 0, %v81
  %83 = vst [vmem:[#allocation4] sm:$0x11] %v82
  %v84 = vld [vmem:[#allocation4 + $0x10] sm:$0x11]
  %v85 = vsel %vm53, 0, %v84
  %86 = vst [vmem:[#allocation4 + $0x10] sm:$0x11] %v85
  %v87 = vld [vmem:[#allocation4 + $0x8] sm:$0x11]
  %v88 = vsel %vm68, 0, %v87
  %89 = vst [vmem:[#allocation4 + $0x8] sm:$0x11] %v88
  %v90 = vld [vmem:[#allocation4 + $0x18] sm:$0x11]
  %v91 = vsel %vm68, 0, %v90
  %92 = vst [vmem:[#allocation4 + $0x18] sm:$0x11] %v91
  %v93 = vld [vmem:[%s0] sm:$0xf]
  %v94 = vld [vmem:[%s0 + $0x4] sm:$0xf]
  %v96 = vshrl.u32 %v93, 16
  %v98 = vrot.slane %v96, 7
  %v99 = vshll.u32 %v93, 16
  %v101 = vor.u32 %v98, %v99
  %v102 = vrot.slane %v98, 4
  %v104 = vshrl.u32 %v94, 16
  %v106 = vrot.slane %v104, 7
  %v107 = vshll.u32 %v94, 16
  %v109 = vor.u32 %v106, %v107
  %v110 = vrot.slane %v106, 4
  %vm115 = vcmask 1043456
  %vm116 = vmand %vm115, %vm42
  %v117 = vld [vmem:[#allocation2] sm:$0xf]
  %v118 = vsel %vm116, %v101, %v117
  %119 = vst [vmem:[#allocation2] sm:$0xf] %v118
  %v120 = vld [vmem:[#allocation2 + $0x4] sm:$0x1]
  %v121 = vsel %vm35, %v102, %v120
  %122 = vst [vmem:[#allocation2 + $0x4] sm:$0x1] %v121
  %v123 = vld [vmem:[#allocation2 + $0x8] sm:$0xf]
  %v124 = vsel %vm116, %v109, %v123
  %125 = vst [vmem:[#allocation2 + $0x8] sm:$0xf] %v124
  %v126 = vld [vmem:[#allocation2 + $0xc] sm:$0x1]
  %v127 = vsel %vm35, %v110, %v126
  %128 = vst [vmem:[#allocation2 + $0xc] sm:$0x1] %v127
  %v129 = vld [vmem:[%s1] sm:$0xf]
  %v130 = vld [vmem:[%s1 + $0x4] sm:$0xf]
  %v132 = vshrl.u32 %v129, 16
  %v134 = vrot.slane %v132, 7
  %v135 = vshll.u32 %v129, 16
  %v137 = vor.u32 %v134, %v135
  %v138 = vrot.slane %v134, 4
  %v140 = vshrl.u32 %v130, 16
  %v142 = vrot.slane %v140, 7
  %v143 = vshll.u32 %v130, 16
  %v145 = vor.u32 %v142, %v143
  %v146 = vrot.slane %v142, 4
  %v151 = vld [vmem:[#allocation3 + $0x4] sm:$0xf]
  %v152 = vsel %vm116, %v137, %v151
  %153 = vst [vmem:[#allocation3 + $0x4] sm:$0xf] %v152
  %v154 = vld [vmem:[#allocation3 + $0x14] sm:$0x1]
  %v155 = vsel %vm35, %v138, %v154
  %156 = vst [vmem:[#allocation3 + $0x14] sm:$0x1] %v155
  %v157 = vld [vmem:[#allocation3 + $0x24] sm:$0xf]
  %v158 = vsel %vm116, %v145, %v157
  %159 = vst [vmem:[#allocation3 + $0x24] sm:$0xf] %v158
  %v160 = vld [vmem:[#allocation3 + $0x34] sm:$0x1]
  %v161 = vsel %vm35, %v146, %v160
  %162 = vst [vmem:[#allocation3 + $0x34] sm:$0x1] %v161
  %v163 = vld [vmem:[%s2] sm:$0xf]
  %v164 = vld [vmem:[%s2 + $0x4] sm:$0xf]
  %v166 = vshrl.u32 %v163, 16
  %v168 = vrot.slane %v166, 7
  %v169 = vshll.u32 %v163, 16
  %v171 = vor.u32 %v168, %v169
  %v172 = vrot.slane %v168, 4
  %v174 = vshrl.u32 %v164, 16
  %v176 = vrot.slane %v174, 7
  %v177 = vshll.u32 %v164, 16
  %v179 = vor.u32 %v176, %v177
  %v180 = vrot.slane %v176, 4
  %v185 = vld [vmem:[#allocation3 + $0xc] sm:$0xf]
  %v186 = vsel %vm116, %v171, %v185
  %187 = vst [vmem:[#allocation3 + $0xc] sm:$0xf] %v186
  %v188 = vld [vmem:[#allocation3 + $0x1c] sm:$0x1]
  %v189 = vsel %vm35, %v172, %v188
  %190 = vst [vmem:[#allocation3 + $0x1c] sm:$0x1] %v189
  %v191 = vld [vmem:[#allocation3 + $0x2c] sm:$0xf]
  %v192 = vsel %vm116, %v179, %v191
  %193 = vst [vmem:[#allocation3 + $0x2c] sm:$0xf] %v192
  %v194 = vld [vmem:[#allocation3 + $0x3c] sm:$0x1]
  %v195 = vsel %vm35, %v180, %v194
  %196 = vst [vmem:[#allocation3 + $0x3c] sm:$0x1] %v195
  %v197 = vld [vmem:[#allocation2] sm:$0xf]
  %v198 = vld [vmem:[#allocation2 + $0x8] sm:$0xf]
  %v199 = vld [vmem:[%s0] sm:$0xf]
  %v200 = vld [vmem:[%s0 + $0x4] sm:$0xf]
  %v201 = vld [vmem:[#allocation2] sm:$0xe]
  %v202 = vld [vmem:[#allocation2 + $0x4] sm:$0x1]
  %v203 = vld [vmem:[#allocation2 + $0x8] sm:$0xe]
  %v204 = vld [vmem:[#allocation2 + $0xc] sm:$0x1]
  %vm209 = vcmask 1042432
  %vm210 = vcmask 1046532
  %vm211 = vmor %vm209, %vm210
  %v212 = vrot.slane %v201, 5
  %v213 = vrot.slane %v212, 4
  %v214 = vrot.slane %v202, 5
  %v215 = vsel %vm211, %v213, %v214
  %v216 = vrot.slane %v203, 5
  %v217 = vrot.slane %v216, 4
  %v218 = vrot.slane %v204, 5
  %v219 = vsel %vm211, %v217, %v218
  %v220 = vld [vmem:[%s3 + $0x4] sm:$0xff]
  %v221 = vld [vmem:[%s3 + $0x14] sm:$0xff]
  %v222 = vld [vmem:[%s3 + $0x24] sm:$0xff]
  %v223 = vld [vmem:[%s3 + $0x34] sm:$0xff]
  %v224 = vld [vmem:[%s3 + $0x44] sm:$0xff]
  %v225 = vld [vmem:[%s3 + $0x54] sm:$0xff]
  %v226 = vld [vmem:[%s3 + $0x64] sm:$0xff]
  %v227 = vld [vmem:[%s3 + $0x74] sm:$0xff]
  %v228 = vld [vmem:[%s3 + $0x84] sm:$0xff]
  %v229 = vld [vmem:[%s3 + $0x94] sm:$0xff]
  %v230 = vld [vmem:[%s3 + $0xa4] sm:$0xff]
  %v231 = vld [vmem:[%s3 + $0xb4] sm:$0xff]
  %v232 = vld [vmem:[%s3 + $0xc4] sm:$0xff]
  %v233 = vld [vmem:[%s3 + $0xd4] sm:$0xff]
  %v234 = vld [vmem:[%s3 + $0xe4] sm:$0xff]
  %v235 = vld [vmem:[%s3 + $0xf4] sm:$0xff]
  %v238 = vunpack.c.l.b16 %v199
  %v239 = vunpack.c.l.b16 %v200
  %v240 = vpack.c.b16 %v239, %v238
  %v258 = vunpack.c.l.b16 %v220
  %v259 = vunpack.c.h.b16 %v220
  %v260 = vunpack.c.l.b16 %v221
  %v261 = vunpack.c.h.b16 %v221
  %v262 = vunpack.c.l.b16 %v222
  %v263 = vunpack.c.h.b16 %v222
  %v264 = vunpack.c.l.b16 %v223
  %v265 = vunpack.c.h.b16 %v223
  %v266 = vunpack.c.l.b16 %v224
  %v267 = vunpack.c.h.b16 %v224
  %v268 = vunpack.c.l.b16 %v225
  %v269 = vunpack.c.h.b16 %v225
  %v270 = vunpack.c.l.b16 %v226
  %v271 = vunpack.c.h.b16 %v226
  %v272 = vunpack.c.l.b16 %v227
  %v273 = vunpack.c.h.b16 %v227
  %v274 = vunpack.c.l.b16 %v228
  %v275 = vunpack.c.h.b16 %v228
  %v276 = vunpack.c.l.b16 %v229
  %v277 = vunpack.c.h.b16 %v229
  %v278 = vunpack.c.l.b16 %v230
  %v279 = vunpack.c.h.b16 %v230
  %v280 = vunpack.c.l.b16 %v231
  %v281 = vunpack.c.h.b16 %v231
  %v282 = vunpack.c.l.b16 %v232
  %v283 = vunpack.c.h.b16 %v232
  %v284 = vunpack.c.l.b16 %v233
  %v285 = vunpack.c.h.b16 %v233
  %v286 = vunpack.c.l.b16 %v234
  %v287 = vunpack.c.h.b16 %v234
  %v288 = vunpack.c.l.b16 %v235
  %v289 = vunpack.c.h.b16 %v235
  %v290 = vpack.c.b16 %v260, %v258
  %v291 = vpack.c.b16 %v261, %v259
  %v292 = vpack.c.b16 %v264, %v262
  %v293 = vpack.c.b16 %v265, %v263
  %v294 = vpack.c.b16 %v268, %v266
  %v295 = vpack.c.b16 %v269, %v267
  %v296 = vpack.c.b16 %v272, %v270
  %v297 = vpack.c.b16 %v273, %v271
  %v298 = vpack.c.b16 %v276, %v274
  %v299 = vpack.c.b16 %v277, %v275
  %v300 = vpack.c.b16 %v280, %v278
  %v301 = vpack.c.b16 %v281, %v279
  %v302 = vpack.c.b16 %v284, %v282
  %v303 = vpack.c.b16 %v285, %v283
  %v304 = vpack.c.b16 %v288, %v286
  %v305 = vpack.c.b16 %v289, %v287
  %322 = vmatprep.subr.bf16.mxu0 %v305
  %323 = vmatpush1.bf16.msra.mxu0 %v304
  %324 = vmatprep.subr.bf16.mxu0 %v303
  %325 = vmatpush1.bf16.msra.mxu0 %v302
  %326 = vmatprep.subr.bf16.mxu0 %v301
  %327 = vmatpush1.bf16.msra.mxu0 %v300
  %328 = vmatprep.subr.bf16.mxu0 %v299
  %329 = vmatpush1.bf16.msra.mxu0 %v298
  %330 = vmatprep.subr.bf16.mxu0 %v297
  %331 = vmatpush1.bf16.msra.mxu0 %v296
  %332 = vmatprep.subr.bf16.mxu0 %v295
  %333 = vmatpush1.bf16.msra.mxu0 %v294
  %334 = vmatprep.subr.bf16.mxu0 %v293
  %335 = vmatpush1.bf16.msra.mxu0 %v292
  %336 = vmatprep.subr.bf16.mxu0 %v291
  %337 = vmatpush1.bf16.msra.mxu0 %v290
  %338 = vmatprep.subr.bf16.mxu0 0
  %339 = vmatpush2.bf16.msra.mxu0 0
  %340 = vmatprep.subr.bf16.mxu0 0
  %341 = vmatpush2.bf16.msra.mxu0 0
  %342 = vmatprep.subr.bf16.mxu0 0
  %343 = vmatpush2.bf16.msra.mxu0 0
  %344 = vmatprep.subr.bf16.mxu0 0
  %345 = vmatpush2.bf16.msra.mxu0 0
  %346 = vmatprep.subr.bf16.mxu0 0
  %347 = vmatpush2.bf16.msra.mxu0 0
  %348 = vmatprep.subr.bf16.mxu0 0
  %349 = vmatpush2.bf16.msra.mxu0 0
  %350 = vmatprep.subr.bf16.mxu0 0
  %351 = vmatpush2.bf16.msra.mxu0 0
  %352 = vmatprep.subr.bf16.mxu0 0
  %353 = vmatpush2.bf16.msra.mxu0 0
  %354 = vmatprep.mubr.bf16.mxu0 0
  %355 = vmatmul.mubr.bf16.gmra.mxu0 %v240
  %v356 = vpop.f32.mrf.mxu0
  %v357 = vadd.f32 0.0, %v356
  %v358 = vpop.f32.mrf.mxu0
  %v359 = vadd.f32 0.0, %v358
  %v360 = vpop.f32.mrf.mxu0
  %v361 = vadd.f32 0.0, %v360
  %v362 = vpop.f32.mrf.mxu0
  %v363 = vadd.f32 0.0, %v362
  %364 = vdwg.mxu0
  %v365 = vld [vmem:[%s8] sm:$0x1]
  %v366 = vld [vmem:[%s3] sm:$0xf]
  %v367 = vld [vmem:[%s3 + $0x10] sm:$0xf]
  %v368 = vld [vmem:[%s3 + $0x20] sm:$0xf]
  %v369 = vld [vmem:[%s3 + $0x30] sm:$0xf]
  %v370 = vld [vmem:[%s3 + $0x40] sm:$0xf]
  %v371 = vld [vmem:[%s3 + $0x50] sm:$0xf]
  %v372 = vld [vmem:[%s3 + $0x60] sm:$0xf]
  %v373 = vld [vmem:[%s3 + $0x70] sm:$0xf]
  %v374 = vld [vmem:[%s3 + $0x80] sm:$0xf]
  %v375 = vld [vmem:[%s3 + $0x90] sm:$0xf]
  %v376 = vld [vmem:[%s3 + $0xa0] sm:$0xf]
  %v377 = vld [vmem:[%s3 + $0xb0] sm:$0xf]
  %v378 = vld [vmem:[%s3 + $0xc0] sm:$0xf]
  %v379 = vld [vmem:[%s3 + $0xd0] sm:$0xf]
  %v380 = vld [vmem:[%s3 + $0xe0] sm:$0xf]
  %v381 = vld [vmem:[%s3 + $0xf0] sm:$0xf]
  %v384 = vunpack.c.l.b16 %v197
  %v385 = vunpack.c.l.b16 %v198
  %v386 = vpack.c.b16 %v385, %v384
  %v404 = vunpack.c.l.b16 %v366
  %v405 = vunpack.c.l.b16 %v367
  %v406 = vunpack.c.l.b16 %v368
  %v407 = vunpack.c.l.b16 %v369
  %v408 = vunpack.c.l.b16 %v370
  %v409 = vunpack.c.l.b16 %v371
  %v410 = vunpack.c.l.b16 %v372
  %v411 = vunpack.c.l.b16 %v373
  %v412 = vunpack.c.l.b16 %v374
  %v413 = vunpack.c.l.b16 %v375
  %v414 = vunpack.c.l.b16 %v376
  %v415 = vunpack.c.l.b16 %v377
  %v416 = vunpack.c.l.b16 %v378
  %v417 = vunpack.c.l.b16 %v379
  %v418 = vunpack.c.l.b16 %v380
  %v419 = vunpack.c.l.b16 %v381
  %v420 = vpack.c.b16 %v405, %v404
  %v421 = vpack.c.b16 %v407, %v406
  %v422 = vpack.c.b16 %v409, %v408
  %v423 = vpack.c.b16 %v411, %v410
  %v424 = vpack.c.b16 %v413, %v412
  %v425 = vpack.c.b16 %v415, %v414
  %v426 = vpack.c.b16 %v417, %v416
  %v427 = vpack.c.b16 %v419, %v418
  %436 = vmatprep.subr.bf16.mxu0 0
  %437 = vmatpush1.bf16.msra.mxu0 %v427
  %438 = vmatprep.subr.bf16.mxu0 0
  %439 = vmatpush1.bf16.msra.mxu0 %v426
  %440 = vmatprep.subr.bf16.mxu0 0
  %441 = vmatpush1.bf16.msra.mxu0 %v425
  %442 = vmatprep.subr.bf16.mxu0 0
  %443 = vmatpush1.bf16.msra.mxu0 %v424
  %444 = vmatprep.subr.bf16.mxu0 0
  %445 = vmatpush1.bf16.msra.mxu0 %v423
  %446 = vmatprep.subr.bf16.mxu0 0
  %447 = vmatpush1.bf16.msra.mxu0 %v422
  %448 = vmatprep.subr.bf16.mxu0 0
  %449 = vmatpush1.bf16.msra.mxu0 %v421
  %450 = vmatprep.subr.bf16.mxu0 0
  %451 = vmatpush1.bf16.msra.mxu0 %v420
  %452 = vmatprep.subr.bf16.mxu0 0
  %453 = vmatpush2.bf16.msra.mxu0 0
  %454 = vmatprep.subr.bf16.mxu0 0
  %455 = vmatpush2.bf16.msra.mxu0 0
  %456 = vmatprep.subr.bf16.mxu0 0
  %457 = vmatpush2.bf16.msra.mxu0 0
  %458 = vmatprep.subr.bf16.mxu0 0
  %459 = vmatpush2.bf16.msra.mxu0 0
  %460 = vmatprep.subr.bf16.mxu0 0
  %461 = vmatpush2.bf16.msra.mxu0 0
  %462 = vmatprep.subr.bf16.mxu0 0
  %463 = vmatpush2.bf16.msra.mxu0 0
  %464 = vmatprep.subr.bf16.mxu0 0
  %465 = vmatpush2.bf16.msra.mxu0 0
  %466 = vmatprep.subr.bf16.mxu0 0
  %467 = vmatpush2.bf16.msra.mxu0 0
  %468 = vmatprep.mubr.bf16.mxu0 0
  %469 = vmatmul.mubr.bf16.gmra.mxu0 %v386
  %v470 = vpop.f32.mrf.mxu0
  %v471 = vadd.f32 %v357, %v470
  %v472 = vpop.f32.mrf.mxu0
  %v473 = vpop.f32.mrf.mxu0
  %v474 = vadd.f32 %v361, %v473
  %v475 = vpop.f32.mrf.mxu0
  %476 = vdwg.mxu0
  %v477 = vlaneseq
  %v478 = vshrl.u32 %v477, 7
  %v479 = vsub.s32 0, %v478
  %v480 = vrot.slane %v365, %v479
  %v481 = vadd.f32 %v471, %v480
  %v482 = vadd.f32 %v474, %v480
  %v483 = vld [vmem:[%s3 + $0xc] sm:$0xf]
  %v484 = vld [vmem:[%s3 + $0x1c] sm:$0xf]
  %v485 = vld [vmem:[%s3 + $0x2c] sm:$0xf]
  %v486 = vld [vmem:[%s3 + $0x3c] sm:$0xf]
  %v487 = vld [vmem:[%s3 + $0x4c] sm:$0xf]
  %v488 = vld [vmem:[%s3 + $0x5c] sm:$0xf]
  %v489 = vld [vmem:[%s3 + $0x6c] sm:$0xf]
  %v490 = vld [vmem:[%s3 + $0x7c] sm:$0xf]
  %v491 = vld [vmem:[%s3 + $0x8c] sm:$0xf]
  %v492 = vld [vmem:[%s3 + $0x9c] sm:$0xf]
  %v493 = vld [vmem:[%s3 + $0xac] sm:$0xf]
  %v494 = vld [vmem:[%s3 + $0xbc] sm:$0xf]
  %v495 = vld [vmem:[%s3 + $0xcc] sm:$0xf]
  %v496 = vld [vmem:[%s3 + $0xdc] sm:$0xf]
  %v497 = vld [vmem:[%s3 + $0xec] sm:$0xf]
  %v498 = vld [vmem:[%s3 + $0xfc] sm:$0xf]
  %v499 = vunpack.c.l.b16 %v215
  %v500 = vunpack.c.l.b16 %v219
  %v501 = vpack.c.b16 %v500, %v499
  %v519 = vunpack.c.l.b16 %v483
  %v520 = vunpack.c.l.b16 %v484
  %v521 = vunpack.c.l.b16 %v485
  %v522 = vunpack.c.l.b16 %v486
  %v523 = vunpack.c.l.b16 %v487
  %v524 = vunpack.c.l.b16 %v488
  %v525 = vunpack.c.l.b16 %v489
  %v526 = vunpack.c.l.b16 %v490
  %v527 = vunpack.c.l.b16 %v491
  %v528 = vunpack.c.l.b16 %v492
  %v529 = vunpack.c.l.b16 %v493
  %v530 = vunpack.c.l.b16 %v494
  %v531 = vunpack.c.l.b16 %v495
  %v532 = vunpack.c.l.b16 %v496
  %v533 = vunpack.c.l.b16 %v497
  %v534 = vunpack.c.l.b16 %v498
  %v535 = vpack.c.b16 %v520, %v519
  %v536 = vpack.c.b16 %v522, %v521
  %v537 = vpack.c.b16 %v524, %v523
  %v538 = vpack.c.b16 %v526, %v525
  %v539 = vpack.c.b16 %v528, %v527
  %v540 = vpack.c.b16 %v530, %v529
  %v541 = vpack.c.b16 %v532, %v531
  %v542 = vpack.c.b16 %v534, %v533
  %551 = vmatprep.subr.bf16.mxu0 0
  %552 = vmatpush1.bf16.msra.mxu0 %v542
  %553 = vmatprep.subr.bf16.mxu0 0
  %554 = vmatpush1.bf16.msra.mxu0 %v541
  %555 = vmatprep.subr.bf16.mxu0 0
  %556 = vmatpush1.bf16.msra.mxu0 %v540
  %557 = vmatprep.subr.bf16.mxu0 0
  %558 = vmatpush1.bf16.msra.mxu0 %v539
  %559 = vmatprep.subr.bf16.mxu0 0
  %560 = vmatpush1.bf16.msra.mxu0 %v538
  %561 = vmatprep.subr.bf16.mxu0 0
  %562 = vmatpush1.bf16.msra.mxu0 %v537
  %563 = vmatprep.subr.bf16.mxu0 0
  %564 = vmatpush1.bf16.msra.mxu0 %v536
  %565 = vmatprep.subr.bf16.mxu0 0
  %566 = vmatpush1.bf16.msra.mxu0 %v535
  %567 = vmatprep.subr.bf16.mxu0 0
  %568 = vmatpush2.bf16.msra.mxu0 0
  %569 = vmatprep.subr.bf16.mxu0 0
  %570 = vmatpush2.bf16.msra.mxu0 0
  %571 = vmatprep.subr.bf16.mxu0 0
  %572 = vmatpush2.bf16.msra.mxu0 0
  %573 = vmatprep.subr.bf16.mxu0 0
  %574 = vmatpush2.bf16.msra.mxu0 0
  %575 = vmatprep.subr.bf16.mxu0 0
  %576 = vmatpush2.bf16.msra.mxu0 0
  %577 = vmatprep.subr.bf16.mxu0 0
  %578 = vmatpush2.bf16.msra.mxu0 0
  %579 = vmatprep.subr.bf16.mxu0 0
  %580 = vmatpush2.bf16.msra.mxu0 0
  %581 = vmatprep.subr.bf16.mxu0 0
  %582 = vmatpush2.bf16.msra.mxu0 0
  %583 = vmatprep.mubr.bf16.mxu0 0
  %584 = vmatmul.mubr.bf16.gmra.mxu0 %v501
  %v585 = vpop.f32.mrf.mxu0
  %v586 = vadd.f32 %v359, %v585
  %v587 = vpop.f32.mrf.mxu0
  %v588 = vpop.f32.mrf.mxu0
  %v589 = vadd.f32 %v363, %v588
  %v590 = vpop.f32.mrf.mxu0
  %591 = vdwg.mxu0
  %v592 = vadd.f32 %v586, %v480
  %v593 = vadd.f32 %v589, %v480
  %v594 = vpack.c.bf16 %v482, %v481
  %v596 = vunpack.c.l.b16 %v594
  %v597 = vunpack.c.h.b16 %v594
  %v598 = vpack.c.b16 %v596, %v596
  %v599 = vpack.c.b16 %v597, %v597
  %v601 = vshrl.u32 %v598, 16
  %v603 = vrot.slane %v601, 7
  %v604 = vshll.u32 %v598, 16
  %v606 = vor.u32 %v603, %v604
  %v607 = vrot.slane %v603, 4
  %v609 = vshrl.u32 %v599, 16
  %v611 = vrot.slane %v609, 7
  %v612 = vshll.u32 %v599, 16
  %v614 = vor.u32 %v611, %v612
  %v615 = vrot.slane %v611, 4
  %v620 = vld [vmem:[#allocation3] sm:$0xf]
  %v621 = vsel %vm116, %v606, %v620
  %622 = vst [vmem:[#allocation3] sm:$0xf] %v621
  %v623 = vld [vmem:[#allocation3 + $0x10] sm:$0x1]
  %v624 = vsel %vm35, %v607, %v623
  %625 = vst [vmem:[#allocation3 + $0x10] sm:$0x1] %v624
  %v626 = vld [vmem:[#allocation3 + $0x20] sm:$0xf]
  %v627 = vsel %vm116, %v614, %v626
  %628 = vst [vmem:[#allocation3 + $0x20] sm:$0xf] %v627
  %v629 = vld [vmem:[#allocation3 + $0x30] sm:$0x1]
  %v630 = vsel %vm35, %v615, %v629
  %631 = vst [vmem:[#allocation3 + $0x30] sm:$0x1] %v630
  %v632 = vpack.c.bf16 %v593, %v592
  %v634 = vunpack.c.l.b16 %v632
  %v635 = vunpack.c.h.b16 %v632
  %v636 = vpack.c.b16 %v634, %v634
  %v637 = vpack.c.b16 %v635, %v635
  %v639 = vshrl.u32 %v636, 16
  %v641 = vrot.slane %v639, 7
  %v642 = vshll.u32 %v636, 16
  %v644 = vor.u32 %v641, %v642
  %v645 = vrot.slane %v641, 4
  %v647 = vshrl.u32 %v637, 16
  %v649 = vrot.slane %v647, 7
  %v650 = vshll.u32 %v637, 16
  %v652 = vor.u32 %v649, %v650
  %v653 = vrot.slane %v649, 4
  %v658 = vld [vmem:[#allocation3 + $0x8] sm:$0xf]
  %v659 = vsel %vm116, %v644, %v658
  %660 = vst [vmem:[#allocation3 + $0x8] sm:$0xf] %v659
  %v661 = vld [vmem:[#allocation3 + $0x18] sm:$0x1]
  %v662 = vsel %vm35, %v645, %v661
  %663 = vst [vmem:[#allocation3 + $0x18] sm:$0x1] %v662
  %v664 = vld [vmem:[#allocation3 + $0x28] sm:$0xf]
  %v665 = vsel %vm116, %v652, %v664
  %666 = vst [vmem:[#allocation3 + $0x28] sm:$0xf] %v665
  %v667 = vld [vmem:[#allocation3 + $0x38] sm:$0x1]
  %v668 = vsel %vm35, %v653, %v667
  %669 = vst [vmem:[#allocation3 + $0x38] sm:$0x1] %v668
  %v670 = vld [vmem:[#allocation3] sm:$0xff]
  %v671 = vld [vmem:[#allocation3 + $0x8] sm:$0xff]
  %v672 = vld [vmem:[#allocation3 + $0x10] sm:$0x11]
  %v673 = vld [vmem:[#allocation3 + $0x18] sm:$0x11]
  %v674 = vld [vmem:[#allocation3 + $0x20] sm:$0xff]
  %v675 = vld [vmem:[#allocation3 + $0x28] sm:$0xff]
  %v676 = vld [vmem:[#allocation3 + $0x30] sm:$0x11]
  %v677 = vld [vmem:[#allocation3 + $0x38] sm:$0x11]
  %vm678 = vsmask.f32 3328
  %vm679 = vsmask.f32 7440
  %vm680 = vmor %vm678, %vm679
  %v682 = vshrl.u32 %v670, 16
  %v684 = vrot.slane %v682, 4
  %v685 = vshll.u32 %v670, 16
  %v687 = vrot.slane %v685, 5
  %v688 = vor.u32 %v684, %v687
  %v689 = vrot.slane %v688, 4
  %v691 = vshll.u32 %v672, 16
  %v693 = vrot.slane %v691, 5
  %v694 = vsel %vm680, %v689, %v693
  %v696 = vshrl.u32 %v671, 16
  %v698 = vrot.slane %v696, 4
  %v699 = vshll.u32 %v671, 16
  %v701 = vrot.slane %v699, 5
  %v702 = vor.u32 %v698, %v701
  %v703 = vrot.slane %v702, 4
  %v705 = vshll.u32 %v673, 16
  %v707 = vrot.slane %v705, 5
  %v708 = vsel %vm680, %v703, %v707
  %v710 = vshrl.u32 %v674, 16
  %v712 = vrot.slane %v710, 4
  %v713 = vshll.u32 %v674, 16
  %v715 = vrot.slane %v713, 5
  %v716 = vor.u32 %v712, %v715
  %v717 = vrot.slane %v716, 4
  %v719 = vshll.u32 %v676, 16
  %v721 = vrot.slane %v719, 5
  %v722 = vsel %vm680, %v717, %v721
  %v724 = vshrl.u32 %v675, 16
  %v726 = vrot.slane %v724, 4
  %v727 = vshll.u32 %v675, 16
  %v729 = vrot.slane %v727, 5
  %v730 = vor.u32 %v726, %v729
  %v731 = vrot.slane %v730, 4
  %v733 = vshll.u32 %v677, 16
  %v735 = vrot.slane %v733, 5
  %v736 = vsel %vm680, %v731, %v735
  %v737 = vld [vmem:[%s4] sm:$0xff]
  %v738 = vld [vmem:[%s4 + $0x8] sm:$0xff]
  %v739 = vld [vmem:[%s4 + $0x10] sm:$0xff]
  %v740 = vld [vmem:[%s4 + $0x18] sm:$0xff]
  %v741 = vld [vmem:[%s4 + $0x20] sm:$0xff]
  %v742 = vld [vmem:[%s4 + $0x28] sm:$0xff]
  %v743 = vld [vmem:[%s4 + $0x30] sm:$0xff]
  %v744 = vld [vmem:[%s4 + $0x38] sm:$0xff]
  %v745 = vld [vmem:[%s4 + $0x40] sm:$0xff]
  %v746 = vld [vmem:[%s4 + $0x48] sm:$0xff]
  %v747 = vld [vmem:[%s4 + $0x50] sm:$0xff]
  %v748 = vld [vmem:[%s4 + $0x58] sm:$0xff]
  %v749 = vld [vmem:[%s4 + $0x60] sm:$0xff]
  %v750 = vld [vmem:[%s4 + $0x68] sm:$0xff]
  %v751 = vld [vmem:[%s4 + $0x70] sm:$0xff]
  %v752 = vld [vmem:[%s4 + $0x78] sm:$0xff]
  %v753 = vld [vmem:[%s4 + $0x80] sm:$0xff]
  %v754 = vld [vmem:[%s4 + $0x88] sm:$0xff]
  %v755 = vld [vmem:[%s4 + $0x90] sm:$0xff]
  %v756 = vld [vmem:[%s4 + $0x98] sm:$0xff]
  %v757 = vld [vmem:[%s4 + $0xa0] sm:$0xff]
  %v758 = vld [vmem:[%s4 + $0xa8] sm:$0xff]
  %v759 = vld [vmem:[%s4 + $0xb0] sm:$0xff]
  %v760 = vld [vmem:[%s4 + $0xb8] sm:$0xff]
  %v761 = vld [vmem:[%s4 + $0xc0] sm:$0xff]
  %v762 = vld [vmem:[%s4 + $0xc8] sm:$0xff]
  %v763 = vld [vmem:[%s4 + $0xd0] sm:$0xff]
  %v764 = vld [vmem:[%s4 + $0xd8] sm:$0xff]
  %v765 = vld [vmem:[%s4 + $0xe0] sm:$0xff]
  %v766 = vld [vmem:[%s4 + $0xe8] sm:$0xff]
  %v767 = vld [vmem:[%s4 + $0xf0] sm:$0xff]
  %v768 = vld [vmem:[%s4 + $0xf8] sm:$0xff]
  %v769 = vld [vmem:[%s4 + $0x100] sm:$0xff]
  %v770 = vld [vmem:[%s4 + $0x108] sm:$0xff]
  %v771 = vld [vmem:[%s4 + $0x110] sm:$0xff]
  %v772 = vld [vmem:[%s4 + $0x118] sm:$0xff]
  %v773 = vld [vmem:[%s4 + $0x120] sm:$0xff]
  %v774 = vld [vmem:[%s4 + $0x128] sm:$0xff]
  %v775 = vld [vmem:[%s4 + $0x130] sm:$0xff]
  %v776 = vld [vmem:[%s4 + $0x138] sm:$0xff]
  %v777 = vld [vmem:[%s4 + $0x140] sm:$0xff]
  %v778 = vld [vmem:[%s4 + $0x148] sm:$0xff]
  %v779 = vld [vmem:[%s4 + $0x150] sm:$0xff]
  %v780 = vld [vmem:[%s4 + $0x158] sm:$0xff]
  %v781 = vld [vmem:[%s4 + $0x160] sm:$0xff]
  %v782 = vld [vmem:[%s4 + $0x168] sm:$0xff]
  %v783 = vld [vmem:[%s4 + $0x170] sm:$0xff]
  %v784 = vld [vmem:[%s4 + $0x178] sm:$0xff]
  %v785 = vld [vmem:[%s4 + $0x180] sm:$0xff]
  %v786 = vld [vmem:[%s4 + $0x188] sm:$0xff]
  %v787 = vld [vmem:[%s4 + $0x190] sm:$0xff]
  %v788 = vld [vmem:[%s4 + $0x198] sm:$0xff]
  %v789 = vld [vmem:[%s4 + $0x1a0] sm:$0xff]
  %v790 = vld [vmem:[%s4 + $0x1a8] sm:$0xff]
  %v791 = vld [vmem:[%s4 + $0x1b0] sm:$0xff]
  %v792 = vld [vmem:[%s4 + $0x1b8] sm:$0xff]
  %v793 = vld [vmem:[%s4 + $0x1c0] sm:$0xff]
  %v794 = vld [vmem:[%s4 + $0x1c8] sm:$0xff]
  %v795 = vld [vmem:[%s4 + $0x1d0] sm:$0xff]
  %v796 = vld [vmem:[%s4 + $0x1d8] sm:$0xff]
  %v797 = vld [vmem:[%s4 + $0x1e0] sm:$0xff]
  %v798 = vld [vmem:[%s4 + $0x1e8] sm:$0xff]
  %v799 = vld [vmem:[%s4 + $0x1f0] sm:$0xff]
  %v800 = vld [vmem:[%s4 + $0x1f8] sm:$0xff]
  %v801 = vunpack.c.l.b16 %v694
  %v802 = vunpack.c.h.b16 %v694
  %v803 = vunpack.c.l.b16 %v708
  %v804 = vunpack.c.h.b16 %v708
  %v805 = vunpack.c.l.b16 %v722
  %v806 = vunpack.c.h.b16 %v722
  %v807 = vunpack.c.l.b16 %v736
  %v808 = vunpack.c.h.b16 %v736
  %v809 = vpack.c.b16 %v805, %v801
  %v810 = vpack.c.b16 %v806, %v802
  %v811 = vpack.c.b16 %v807, %v803
  %v812 = vpack.c.b16 %v808, %v804
  %v881 = vunpack.c.l.b16 %v737
  %v882 = vunpack.c.h.b16 %v737
  %v883 = vunpack.c.l.b16 %v738
  %v884 = vunpack.c.h.b16 %v738
  %v885 = vunpack.c.l.b16 %v739
  %v886 = vunpack.c.h.b16 %v739
  %v887 = vunpack.c.l.b16 %v740
  %v888 = vunpack.c.h.b16 %v740
  %v889 = vunpack.c.l.b16 %v741
  %v890 = vunpack.c.h.b16 %v741
  %v891 = vunpack.c.l.b16 %v742
  %v892 = vunpack.c.h.b16 %v742
  %v893 = vunpack.c.l.b16 %v743
  %v894 = vunpack.c.h.b16 %v743
  %v895 = vunpack.c.l.b16 %v744
  %v896 = vunpack.c.h.b16 %v744
  %v897 = vunpack.c.l.b16 %v745
  %v898 = vunpack.c.h.b16 %v745
  %v899 = vunpack.c.l.b16 %v746
  %v900 = vunpack.c.h.b16 %v746
  %v901 = vunpack.c.l.b16 %v747
  %v902 = vunpack.c.h.b16 %v747
  %v903 = vunpack.c.l.b16 %v748
  %v904 = vunpack.c.h.b16 %v748
  %v905 = vunpack.c.l.b16 %v749
  %v906 = vunpack.c.h.b16 %v749
  %v907 = vunpack.c.l.b16 %v750
  %v908 = vunpack.c.h.b16 %v750
  %v909 = vunpack.c.l.b16 %v751
  %v910 = vunpack.c.h.b16 %v751
  %v911 = vunpack.c.l.b16 %v752
  %v912 = vunpack.c.h.b16 %v752
  %v913 = vunpack.c.l.b16 %v753
  %v914 = vunpack.c.h.b16 %v753
  %v915 = vunpack.c.l.b16 %v754
  %v916 = vunpack.c.h.b16 %v754
  %v917 = vunpack.c.l.b16 %v755
  %v918 = vunpack.c.h.b16 %v755
  %v919 = vunpack.c.l.b16 %v756
  %v920 = vunpack.c.h.b16 %v756
  %v921 = vunpack.c.l.b16 %v757
  %v922 = vunpack.c.h.b16 %v757
  %v923 = vunpack.c.l.b16 %v758
  %v924 = vunpack.c.h.b16 %v758
  %v925 = vunpack.c.l.b16 %v759
  %v926 = vunpack.c.h.b16 %v759
  %v927 = vunpack.c.l.b16 %v760
  %v928 = vunpack.c.h.b16 %v760
  %v929 = vunpack.c.l.b16 %v761
  %v930 = vunpack.c.h.b16 %v761
  %v931 = vunpack.c.l.b16 %v762
  %v932 = vunpack.c.h.b16 %v762
  %v933 = vunpack.c.l.b16 %v763
  %v934 = vunpack.c.h.b16 %v763
  %v935 = vunpack.c.l.b16 %v764
  %v936 = vunpack.c.h.b16 %v764
  %v937 = vunpack.c.l.b16 %v765
  %v938 = vunpack.c.h.b16 %v765
  %v939 = vunpack.c.l.b16 %v766
  %v940 = vunpack.c.h.b16 %v766
  %v941 = vunpack.c.l.b16 %v767
  %v942 = vunpack.c.h.b16 %v767
  %v943 = vunpack.c.l.b16 %v768
  %v944 = vunpack.c.h.b16 %v768
  %v945 = vunpack.c.l.b16 %v769
  %v946 = vunpack.c.h.b16 %v769
  %v947 = vunpack.c.l.b16 %v770
  %v948 = vunpack.c.h.b16 %v770
  %v949 = vunpack.c.l.b16 %v771
  %v950 = vunpack.c.h.b16 %v771
  %v951 = vunpack.c.l.b16 %v772
  %v952 = vunpack.c.h.b16 %v772
  %v953 = vunpack.c.l.b16 %v773
  %v954 = vunpack.c.h.b16 %v773
  %v955 = vunpack.c.l.b16 %v774
  %v956 = vunpack.c.h.b16 %v774
  %v957 = vunpack.c.l.b16 %v775
  %v958 = vunpack.c.h.b16 %v775
  %v959 = vunpack.c.l.b16 %v776
  %v960 = vunpack.c.h.b16 %v776
  %v961 = vunpack.c.l.b16 %v777
  %v962 = vunpack.c.h.b16 %v777
  %v963 = vunpack.c.l.b16 %v778
  %v964 = vunpack.c.h.b16 %v778
  %v965 = vunpack.c.l.b16 %v779
  %v966 = vunpack.c.h.b16 %v779
  %v967 = vunpack.c.l.b16 %v780
  %v968 = vunpack.c.h.b16 %v780
  %v969 = vunpack.c.l.b16 %v781
  %v970 = vunpack.c.h.b16 %v781
  %v971 = vunpack.c.l.b16 %v782
  %v972 = vunpack.c.h.b16 %v782
  %v973 = vunpack.c.l.b16 %v783
  %v974 = vunpack.c.h.b16 %v783
  %v975 = vunpack.c.l.b16 %v784
  %v976 = vunpack.c.h.b16 %v784
  %v977 = vunpack.c.l.b16 %v785
  %v978 = vunpack.c.h.b16 %v785
  %v979 = vunpack.c.l.b16 %v786
  %v980 = vunpack.c.h.b16 %v786
  %v981 = vunpack.c.l.b16 %v787
  %v982 = vunpack.c.h.b16 %v787
  %v983 = vunpack.c.l.b16 %v788
  %v984 = vunpack.c.h.b16 %v788
  %v985 = vunpack.c.l.b16 %v789
  %v986 = vunpack.c.h.b16 %v789
  %v987 = vunpack.c.l.b16 %v790
  %v988 = vunpack.c.h.b16 %v790
  %v989 = vunpack.c.l.b16 %v791
  %v990 = vunpack.c.h.b16 %v791
  %v991 = vunpack.c.l.b16 %v792
  %v992 = vunpack.c.h.b16 %v792
  %v993 = vunpack.c.l.b16 %v793
  %v994 = vunpack.c.h.b16 %v793
  %v995 = vunpack.c.l.b16 %v794
  %v996 = vunpack.c.h.b16 %v794
  %v997 = vunpack.c.l.b16 %v795
  %v998 = vunpack.c.h.b16 %v795
  %v999 = vunpack.c.l.b16 %v796
  %v1000 = vunpack.c.h.b16 %v796
  %v1001 = vunpack.c.l.b16 %v797
  %v1002 = vunpack.c.h.b16 %v797
  %v1003 = vunpack.c.l.b16 %v798
  %v1004 = vunpack.c.h.b16 %v798
  %v1005 = vunpack.c.l.b16 %v799
  %v1006 = vunpack.c.h.b16 %v799
  %v1007 = vunpack.c.l.b16 %v800
  %v1008 = vunpack.c.h.b16 %v800
  %v1009 = vpack.c.b16 %v883, %v881
  %v1010 = vpack.c.b16 %v884, %v882
  %v1011 = vpack.c.b16 %v887, %v885
  %v1012 = vpack.c.b16 %v888, %v886
  %v1013 = vpack.c.b16 %v891, %v889
  %v1014 = vpack.c.b16 %v892, %v890
  %v1015 = vpack.c.b16 %v895, %v893
  %v1016 = vpack.c.b16 %v896, %v894
  %v1017 = vpack.c.b16 %v899, %v897
  %v1018 = vpack.c.b16 %v900, %v898
  %v1019 = vpack.c.b16 %v903, %v901
  %v1020 = vpack.c.b16 %v904, %v902
  %v1021 = vpack.c.b16 %v907, %v905
  %v1022 = vpack.c.b16 %v908, %v906
  %v1023 = vpack.c.b16 %v911, %v909
  %v1024 = vpack.c.b16 %v912, %v910
  %v1025 = vpack.c.b16 %v915, %v913
  %v1026 = vpack.c.b16 %v916, %v914
  %v1027 = vpack.c.b16 %v919, %v917
  %v1028 = vpack.c.b16 %v920, %v918
  %v1029 = vpack.c.b16 %v923, %v921
  %v1030 = vpack.c.b16 %v924, %v922
  %v1031 = vpack.c.b16 %v927, %v925
  %v1032 = vpack.c.b16 %v928, %v926
  %v1033 = vpack.c.b16 %v931, %v929
  %v1034 = vpack.c.b16 %v932, %v930
  %v1035 = vpack.c.b16 %v935, %v933
  %v1036 = vpack.c.b16 %v936, %v934
  %v1037 = vpack.c.b16 %v939, %v937
  %v1038 = vpack.c.b16 %v940, %v938
  %v1039 = vpack.c.b16 %v943, %v941
  %v1040 = vpack.c.b16 %v944, %v942
  %v1041 = vpack.c.b16 %v947, %v945
  %v1042 = vpack.c.b16 %v948, %v946
  %v1043 = vpack.c.b16 %v951, %v949
  %v1044 = vpack.c.b16 %v952, %v950
  %v1045 = vpack.c.b16 %v955, %v953
  %v1046 = vpack.c.b16 %v956, %v954
  %v1047 = vpack.c.b16 %v959, %v957
  %v1048 = vpack.c.b16 %v960, %v958
  %v1049 = vpack.c.b16 %v963, %v961
  %v1050 = vpack.c.b16 %v964, %v962
  %v1051 = vpack.c.b16 %v967, %v965
  %v1052 = vpack.c.b16 %v968, %v966
  %v1053 = vpack.c.b16 %v971, %v969
  %v1054 = vpack.c.b16 %v972, %v970
  %v1055 = vpack.c.b16 %v975, %v973
  %v1056 = vpack.c.b16 %v976, %v974
  %v1057 = vpack.c.b16 %v979, %v977
  %v1058 = vpack.c.b16 %v980, %v978
  %v1059 = vpack.c.b16 %v983, %v981
  %v1060 = vpack.c.b16 %v984, %v982
  %v1061 = vpack.c.b16 %v987, %v985
  %v1062 = vpack.c.b16 %v988, %v986
  %v1063 = vpack.c.b16 %v991, %v989
  %v1064 = vpack.c.b16 %v992, %v990
  %v1065 = vpack.c.b16 %v995, %v993
  %v1066 = vpack.c.b16 %v996, %v994
  %v1067 = vpack.c.b16 %v999, %v997
  %v1068 = vpack.c.b16 %v1000, %v998
  %v1069 = vpack.c.b16 %v1003, %v1001
  %v1070 = vpack.c.b16 %v1004, %v1002
  %v1071 = vpack.c.b16 %v1007, %v1005
  %v1072 = vpack.c.b16 %v1008, %v1006
  %1137 = vmatprep.subr.bf16.mxu0 %v1024
  %1138 = vmatpush1.bf16.msra.mxu0 %v1023
  %1139 = vmatprep.subr.bf16.mxu0 %v1022
  %1140 = vmatpush1.bf16.msra.mxu0 %v1021
  %1141 = vmatprep.subr.bf16.mxu0 %v1020
  %1142 = vmatpush1.bf16.msra.mxu0 %v1019
  %1143 = vmatprep.subr.bf16.mxu0 %v1018
  %1144 = vmatpush1.bf16.msra.mxu0 %v1017
  %1145 = vmatprep.subr.bf16.mxu0 %v1016
  %1146 = vmatpush1.bf16.msra.mxu0 %v1015
  %1147 = vmatprep.subr.bf16.mxu0 %v1014
  %1148 = vmatpush1.bf16.msra.mxu0 %v1013
  %1149 = vmatprep.subr.bf16.mxu0 %v1012
  %1150 = vmatpush1.bf16.msra.mxu0 %v1011
  %1151 = vmatprep.subr.bf16.mxu0 %v1010
  %1152 = vmatpush1.bf16.msra.mxu0 %v1009
  %1153 = vmatprep.subr.bf16.mxu0 %v1040
  %1154 = vmatpush2.bf16.msra.mxu0 %v1039
  %1155 = vmatprep.subr.bf16.mxu0 %v1038
  %1156 = vmatpush2.bf16.msra.mxu0 %v1037
  %1157 = vmatprep.subr.bf16.mxu0 %v1036
  %1158 = vmatpush2.bf16.msra.mxu0 %v1035
  %1159 = vmatprep.subr.bf16.mxu0 %v1034
  %1160 = vmatpush2.bf16.msra.mxu0 %v1033
  %1161 = vmatprep.subr.bf16.mxu0 %v1032
  %1162 = vmatpush2.bf16.msra.mxu0 %v1031
  %1163 = vmatprep.subr.bf16.mxu0 %v1030
  %1164 = vmatpush2.bf16.msra.mxu0 %v1029
  %1165 = vmatprep.subr.bf16.mxu0 %v1028
  %1166 = vmatpush2.bf16.msra.mxu0 %v1027
  %1167 = vmatprep.subr.bf16.mxu0 %v1026
  %1168 = vmatpush2.bf16.msra.mxu0 %v1025
  %1169 = vmatprep.mubr.bf16.mxu0 %v810
  %1170 = vmatmul.mubr.bf16.gmra.mxu0 %v809
  %v1171 = vpop.f32.mrf.mxu0
  %v1172 = vadd.f32 0.0, %v1171
  %v1173 = vpop.f32.mrf.mxu0
  %v1174 = vadd.f32 0.0, %v1173
  %v1175 = vpop.f32.mrf.mxu0
  %v1176 = vadd.f32 0.0, %v1175
  %v1177 = vpop.f32.mrf.mxu0
  %v1178 = vadd.f32 0.0, %v1177
  %1179 = vdwg.mxu0
  %1180 = vmatprep.subr.bf16.mxu0 %v1056
  %1181 = vmatpush1.bf16.msra.mxu0 %v1055
  %1182 = vmatprep.subr.bf16.mxu0 %v1054
  %1183 = vmatpush1.bf16.msra.mxu0 %v1053
  %1184 = vmatprep.subr.bf16.mxu0 %v1052
  %1185 = vmatpush1.bf16.msra.mxu0 %v1051
  %1186 = vmatprep.subr.bf16.mxu0 %v1050
  %1187 = vmatpush1.bf16.msra.mxu0 %v1049
  %1188 = vmatprep.subr.bf16.mxu0 %v1048
  %1189 = vmatpush1.bf16.msra.mxu0 %v1047
  %1190 = vmatprep.subr.bf16.mxu0 %v1046
  %1191 = vmatpush1.bf16.msra.mxu0 %v1045
  %1192 = vmatprep.subr.bf16.mxu0 %v1044
  %1193 = vmatpush1.bf16.msra.mxu0 %v1043
  %1194 = vmatprep.subr.bf16.mxu0 %v1042
  %1195 = vmatpush1.bf16.msra.mxu0 %v1041
  %1196 = vmatprep.subr.bf16.mxu0 %v1072
  %1197 = vmatpush2.bf16.msra.mxu0 %v1071
  %1198 = vmatprep.subr.bf16.mxu0 %v1070
  %1199 = vmatpush2.bf16.msra.mxu0 %v1069
  %1200 = vmatprep.subr.bf16.mxu0 %v1068
  %1201 = vmatpush2.bf16.msra.mxu0 %v1067
  %1202 = vmatprep.subr.bf16.mxu0 %v1066
  %1203 = vmatpush2.bf16.msra.mxu0 %v1065
  %1204 = vmatprep.subr.bf16.mxu0 %v1064
  %1205 = vmatpush2.bf16.msra.mxu0 %v1063
  %1206 = vmatprep.subr.bf16.mxu0 %v1062
  %1207 = vmatpush2.bf16.msra.mxu0 %v1061
  %1208 = vmatprep.subr.bf16.mxu0 %v1060
  %1209 = vmatpush2.bf16.msra.mxu0 %v1059
  %1210 = vmatprep.subr.bf16.mxu0 %v1058
  %1211 = vmatpush2.bf16.msra.mxu0 %v1057
  %1212 = vmatprep.mubr.bf16.mxu0 %v812
  %1213 = vmatmul.mubr.bf16.gmra.mxu0 %v811
  %v1214 = vpop.f32.mrf.mxu0
  %v1215 = vadd.f32 %v1172, %v1214
  %v1216 = vpop.f32.mrf.mxu0
  %v1217 = vadd.f32 %v1174, %v1216
  %v1218 = vpop.f32.mrf.mxu0
  %v1219 = vadd.f32 %v1176, %v1218
  %v1220 = vpop.f32.mrf.mxu0
  %v1221 = vadd.f32 %v1178, %v1220
  %1222 = vdwg.mxu0
  %v1223 = vld [vmem:[#allocation3 + $0x8] sm:$0xff]
  %v1224 = vld [vmem:[#allocation3 + $0x28] sm:$0xff]
  %v1225 = vld [vmem:[%s5] sm:$0xf]
  %v1226 = vld [vmem:[%s5 + $0x8] sm:$0xf]
  %v1227 = vld [vmem:[%s5 + $0x10] sm:$0xf]
  %v1228 = vld [vmem:[%s5 + $0x18] sm:$0xf]
  %v1229 = vld [vmem:[%s5 + $0x20] sm:$0xf]
  %v1230 = vld [vmem:[%s5 + $0x28] sm:$0xf]
  %v1231 = vld [vmem:[%s5 + $0x30] sm:$0xf]
  %v1232 = vld [vmem:[%s5 + $0x38] sm:$0xf]
  %v1233 = vld [vmem:[%s5 + $0x40] sm:$0xf]
  %v1234 = vld [vmem:[%s5 + $0x48] sm:$0xf]
  %v1235 = vld [vmem:[%s5 + $0x50] sm:$0xf]
  %v1236 = vld [vmem:[%s5 + $0x58] sm:$0xf]
  %v1237 = vld [vmem:[%s5 + $0x60] sm:$0xf]
  %v1238 = vld [vmem:[%s5 + $0x68] sm:$0xf]
  %v1239 = vld [vmem:[%s5 + $0x70] sm:$0xf]
  %v1240 = vld [vmem:[%s5 + $0x78] sm:$0xf]
  %v1241 = vld [vmem:[%s5 + $0x80] sm:$0xf]
  %v1242 = vld [vmem:[%s5 + $0x88] sm:$0xf]
  %v1243 = vld [vmem:[%s5 + $0x90] sm:$0xf]
  %v1244 = vld [vmem:[%s5 + $0x98] sm:$0xf]
  %v1245 = vld [vmem:[%s5 + $0xa0] sm:$0xf]
  %v1246 = vld [vmem:[%s5 + $0xa8] sm:$0xf]
  %v1247 = vld [vmem:[%s5 + $0xb0] sm:$0xf]
  %v1248 = vld [vmem:[%s5 + $0xb8] sm:$0xf]
  %v1249 = vld [vmem:[%s5 + $0xc0] sm:$0xf]
  %v1250 = vld [vmem:[%s5 + $0xc8] sm:$0xf]
  %v1251 = vld [vmem:[%s5 + $0xd0] sm:$0xf]
  %v1252 = vld [vmem:[%s5 + $0xd8] sm:$0xf]
  %v1253 = vld [vmem:[%s5 + $0xe0] sm:$0xf]
  %v1254 = vld [vmem:[%s5 + $0xe8] sm:$0xf]
  %v1255 = vld [vmem:[%s5 + $0xf0] sm:$0xf]
  %v1256 = vld [vmem:[%s5 + $0xf8] sm:$0xf]
  %v1259 = vunpack.c.l.b16 %v1223
  %v1260 = vunpack.c.h.b16 %v1223
  %v1261 = vunpack.c.l.b16 %v1224
  %v1262 = vunpack.c.h.b16 %v1224
  %v1263 = vpack.c.b16 %v1261, %v1259
  %v1264 = vpack.c.b16 %v1262, %v1260
  %v1299 = vunpack.c.l.b16 %v1225
  %v1300 = vunpack.c.l.b16 %v1226
  %v1301 = vunpack.c.l.b16 %v1227
  %v1302 = vunpack.c.l.b16 %v1228
  %v1303 = vunpack.c.l.b16 %v1229
  %v1304 = vunpack.c.l.b16 %v1230
  %v1305 = vunpack.c.l.b16 %v1231
  %v1306 = vunpack.c.l.b16 %v1232
  %v1307 = vunpack.c.l.b16 %v1233
  %v1308 = vunpack.c.l.b16 %v1234
  %v1309 = vunpack.c.l.b16 %v1235
  %v1310 = vunpack.c.l.b16 %v1236
  %v1311 = vunpack.c.l.b16 %v1237
  %v1312 = vunpack.c.l.b16 %v1238
  %v1313 = vunpack.c.l.b16 %v1239
  %v1314 = vunpack.c.l.b16 %v1240
  %v1315 = vunpack.c.l.b16 %v1241
  %v1316 = vunpack.c.l.b16 %v1242
  %v1317 = vunpack.c.l.b16 %v1243
  %v1318 = vunpack.c.l.b16 %v1244
  %v1319 = vunpack.c.l.b16 %v1245
  %v1320 = vunpack.c.l.b16 %v1246
  %v1321 = vunpack.c.l.b16 %v1247
  %v1322 = vunpack.c.l.b16 %v1248
  %v1323 = vunpack.c.l.b16 %v1249
  %v1324 = vunpack.c.l.b16 %v1250
  %v1325 = vunpack.c.l.b16 %v1251
  %v1326 = vunpack.c.l.b16 %v1252
  %v1327 = vunpack.c.l.b16 %v1253
  %v1328 = vunpack.c.l.b16 %v1254
  %v1329 = vunpack.c.l.b16 %v1255
  %v1330 = vunpack.c.l.b16 %v1256
  %v1331 = vpack.c.b16 %v1300, %v1299
  %v1332 = vpack.c.b16 %v1302, %v1301
  %v1333 = vpack.c.b16 %v1304, %v1303
  %v1334 = vpack.c.b16 %v1306, %v1305
  %v1335 = vpack.c.b16 %v1308, %v1307
  %v1336 = vpack.c.b16 %v1310, %v1309
  %v1337 = vpack.c.b16 %v1312, %v1311
  %v1338 = vpack.c.b16 %v1314, %v1313
  %v1339 = vpack.c.b16 %v1316, %v1315
  %v1340 = vpack.c.b16 %v1318, %v1317
  %v1341 = vpack.c.b16 %v1320, %v1319
  %v1342 = vpack.c.b16 %v1322, %v1321
  %v1343 = vpack.c.b16 %v1324, %v1323
  %v1344 = vpack.c.b16 %v1326, %v1325
  %v1345 = vpack.c.b16 %v1328, %v1327
  %v1346 = vpack.c.b16 %v1330, %v1329
  %1363 = vmatprep.subr.bf16.mxu0 0
  %1364 = vmatpush1.bf16.msra.mxu0 %v1338
  %1365 = vmatprep.subr.bf16.mxu0 0
  %1366 = vmatpush1.bf16.msra.mxu0 %v1337
  %1367 = vmatprep.subr.bf16.mxu0 0
  %1368 = vmatpush1.bf16.msra.mxu0 %v1336
  %1369 = vmatprep.subr.bf16.mxu0 0
  %1370 = vmatpush1.bf16.msra.mxu0 %v1335
  %1371 = vmatprep.subr.bf16.mxu0 0
  %1372 = vmatpush1.bf16.msra.mxu0 %v1334
  %1373 = vmatprep.subr.bf16.mxu0 0
  %1374 = vmatpush1.bf16.msra.mxu0 %v1333
  %1375 = vmatprep.subr.bf16.mxu0 0
  %1376 = vmatpush1.bf16.msra.mxu0 %v1332
  %1377 = vmatprep.subr.bf16.mxu0 0
  %1378 = vmatpush1.bf16.msra.mxu0 %v1331
  %1379 = vmatprep.subr.bf16.mxu0 0
  %1380 = vmatpush2.bf16.msra.mxu0 %v1346
  %1381 = vmatprep.subr.bf16.mxu0 0
  %1382 = vmatpush2.bf16.msra.mxu0 %v1345
  %1383 = vmatprep.subr.bf16.mxu0 0
  %1384 = vmatpush2.bf16.msra.mxu0 %v1344
  %1385 = vmatprep.subr.bf16.mxu0 0
  %1386 = vmatpush2.bf16.msra.mxu0 %v1343
  %1387 = vmatprep.subr.bf16.mxu0 0
  %1388 = vmatpush2.bf16.msra.mxu0 %v1342
  %1389 = vmatprep.subr.bf16.mxu0 0
  %1390 = vmatpush2.bf16.msra.mxu0 %v1341
  %1391 = vmatprep.subr.bf16.mxu0 0
  %1392 = vmatpush2.bf16.msra.mxu0 %v1340
  %1393 = vmatprep.subr.bf16.mxu0 0
  %1394 = vmatpush2.bf16.msra.mxu0 %v1339
  %1395 = vmatprep.mubr.bf16.mxu0 %v1264
  %1396 = vmatmul.mubr.bf16.gmra.mxu0 %v1263
  %v1397 = vpop.f32.mrf.mxu0
  %v1398 = vadd.f32 0.0, %v1397
  %v1399 = vpop.f32.mrf.mxu0
  %v1400 = vpop.f32.mrf.mxu0
  %v1401 = vadd.f32 0.0, %v1400
  %v1402 = vpop.f32.mrf.mxu0
  %1403 = vdwg.mxu0
  %v1404 = vadd.f32 %v1215, %v1398
  %v1405 = vadd.f32 %v1219, %v1401
  %v1406 = vld [vmem:[#allocation3] sm:$0xee]
  %v1407 = vld [vmem:[#allocation3 + $0x10] sm:$0x11]
  %v1408 = vld [vmem:[#allocation3 + $0x20] sm:$0xee]
  %v1409 = vld [vmem:[#allocation3 + $0x30] sm:$0x11]
  %v1414 = vrot.slane %v1406, 5
  %v1415 = vrot.slane %v1414, 4
  %v1416 = vrot.slane %v1407, 5
  %v1417 = vsel %vm211, %v1415, %v1416
  %v1418 = vrot.slane %v1408, 5
  %v1419 = vrot.slane %v1418, 4
  %v1420 = vrot.slane %v1409, 5
  %v1421 = vsel %vm211, %v1419, %v1420
  %v1422 = vld [vmem:[%s5 + $0x4] sm:$0xf]
  %v1423 = vld [vmem:[%s5 + $0xc] sm:$0xf]
  %v1424 = vld [vmem:[%s5 + $0x14] sm:$0xf]
  %v1425 = vld [vmem:[%s5 + $0x1c] sm:$0xf]
  %v1426 = vld [vmem:[%s5 + $0x24] sm:$0xf]
  %v1427 = vld [vmem:[%s5 + $0x2c] sm:$0xf]
  %v1428 = vld [vmem:[%s5 + $0x34] sm:$0xf]
  %v1429 = vld [vmem:[%s5 + $0x3c] sm:$0xf]
  %v1430 = vld [vmem:[%s5 + $0x44] sm:$0xf]
  %v1431 = vld [vmem:[%s5 + $0x4c] sm:$0xf]
  %v1432 = vld [vmem:[%s5 + $0x54] sm:$0xf]
  %v1433 = vld [vmem:[%s5 + $0x5c] sm:$0xf]
  %v1434 = vld [vmem:[%s5 + $0x64] sm:$0xf]
  %v1435 = vld [vmem:[%s5 + $0x6c] sm:$0xf]
  %v1436 = vld [vmem:[%s5 + $0x74] sm:$0xf]
  %v1437 = vld [vmem:[%s5 + $0x7c] sm:$0xf]
  %v1438 = vld [vmem:[%s5 + $0x84] sm:$0xf]
  %v1439 = vld [vmem:[%s5 + $0x8c] sm:$0xf]
  %v1440 = vld [vmem:[%s5 + $0x94] sm:$0xf]
  %v1441 = vld [vmem:[%s5 + $0x9c] sm:$0xf]
  %v1442 = vld [vmem:[%s5 + $0xa4] sm:$0xf]
  %v1443 = vld [vmem:[%s5 + $0xac] sm:$0xf]
  %v1444 = vld [vmem:[%s5 + $0xb4] sm:$0xf]
  %v1445 = vld [vmem:[%s5 + $0xbc] sm:$0xf]
  %v1446 = vld [vmem:[%s5 + $0xc4] sm:$0xf]
  %v1447 = vld [vmem:[%s5 + $0xcc] sm:$0xf]
  %v1448 = vld [vmem:[%s5 + $0xd4] sm:$0xf]
  %v1449 = vld [vmem:[%s5 + $0xdc] sm:$0xf]
  %v1450 = vld [vmem:[%s5 + $0xe4] sm:$0xf]
  %v1451 = vld [vmem:[%s5 + $0xec] sm:$0xf]
  %v1452 = vld [vmem:[%s5 + $0xf4] sm:$0xf]
  %v1453 = vld [vmem:[%s5 + $0xfc] sm:$0xf]
  %v1454 = vunpack.c.l.b16 %v1417
  %v1455 = vunpack.c.h.b16 %v1417
  %v1456 = vunpack.c.l.b16 %v1421
  %v1457 = vunpack.c.h.b16 %v1421
  %v1458 = vpack.c.b16 %v1456, %v1454
  %v1459 = vpack.c.b16 %v1457, %v1455
  %v1494 = vunpack.c.l.b16 %v1422
  %v1495 = vunpack.c.l.b16 %v1423
  %v1496 = vunpack.c.l.b16 %v1424
  %v1497 = vunpack.c.l.b16 %v1425
  %v1498 = vunpack.c.l.b16 %v1426
  %v1499 = vunpack.c.l.b16 %v1427
  %v1500 = vunpack.c.l.b16 %v1428
  %v1501 = vunpack.c.l.b16 %v1429
  %v1502 = vunpack.c.l.b16 %v1430
  %v1503 = vunpack.c.l.b16 %v1431
  %v1504 = vunpack.c.l.b16 %v1432
  %v1505 = vunpack.c.l.b16 %v1433
  %v1506 = vunpack.c.l.b16 %v1434
  %v1507 = vunpack.c.l.b16 %v1435
  %v1508 = vunpack.c.l.b16 %v1436
  %v1509 = vunpack.c.l.b16 %v1437
  %v1510 = vunpack.c.l.b16 %v1438
  %v1511 = vunpack.c.l.b16 %v1439
  %v1512 = vunpack.c.l.b16 %v1440
  %v1513 = vunpack.c.l.b16 %v1441
  %v1514 = vunpack.c.l.b16 %v1442
  %v1515 = vunpack.c.l.b16 %v1443
  %v1516 = vunpack.c.l.b16 %v1444
  %v1517 = vunpack.c.l.b16 %v1445
  %v1518 = vunpack.c.l.b16 %v1446
  %v1519 = vunpack.c.l.b16 %v1447
  %v1520 = vunpack.c.l.b16 %v1448
  %v1521 = vunpack.c.l.b16 %v1449
  %v1522 = vunpack.c.l.b16 %v1450
  %v1523 = vunpack.c.l.b16 %v1451
  %v1524 = vunpack.c.l.b16 %v1452
  %v1525 = vunpack.c.l.b16 %v1453
  %v1526 = vpack.c.b16 %v1495, %v1494
  %v1527 = vpack.c.b16 %v1497, %v1496
  %v1528 = vpack.c.b16 %v1499, %v1498
  %v1529 = vpack.c.b16 %v1501, %v1500
  %v1530 = vpack.c.b16 %v1503, %v1502
  %v1531 = vpack.c.b16 %v1505, %v1504
  %v1532 = vpack.c.b16 %v1507, %v1506
  %v1533 = vpack.c.b16 %v1509, %v1508
  %v1534 = vpack.c.b16 %v1511, %v1510
  %v1535 = vpack.c.b16 %v1513, %v1512
  %v1536 = vpack.c.b16 %v1515, %v1514
  %v1537 = vpack.c.b16 %v1517, %v1516
  %v1538 = vpack.c.b16 %v1519, %v1518
  %v1539 = vpack.c.b16 %v1521, %v1520
  %v1540 = vpack.c.b16 %v1523, %v1522
  %v1541 = vpack.c.b16 %v1525, %v1524
  %1558 = vmatprep.subr.bf16.mxu0 0
  %1559 = vmatpush1.bf16.msra.mxu0 %v1533
  %1560 = vmatprep.subr.bf16.mxu0 0
  %1561 = vmatpush1.bf16.msra.mxu0 %v1532
  %1562 = vmatprep.subr.bf16.mxu0 0
  %1563 = vmatpush1.bf16.msra.mxu0 %v1531
  %1564 = vmatprep.subr.bf16.mxu0 0
  %1565 = vmatpush1.bf16.msra.mxu0 %v1530
  %1566 = vmatprep.subr.bf16.mxu0 0
  %1567 = vmatpush1.bf16.msra.mxu0 %v1529
  %1568 = vmatprep.subr.bf16.mxu0 0
  %1569 = vmatpush1.bf16.msra.mxu0 %v1528
  %1570 = vmatprep.subr.bf16.mxu0 0
  %1571 = vmatpush1.bf16.msra.mxu0 %v1527
  %1572 = vmatprep.subr.bf16.mxu0 0
  %1573 = vmatpush1.bf16.msra.mxu0 %v1526
  %1574 = vmatprep.subr.bf16.mxu0 0
  %1575 = vmatpush2.bf16.msra.mxu0 %v1541
  %1576 = vmatprep.subr.bf16.mxu0 0
  %1577 = vmatpush2.bf16.msra.mxu0 %v1540
  %1578 = vmatprep.subr.bf16.mxu0 0
  %1579 = vmatpush2.bf16.msra.mxu0 %v1539
  %1580 = vmatprep.subr.bf16.mxu0 0
  %1581 = vmatpush2.bf16.msra.mxu0 %v1538
  %1582 = vmatprep.subr.bf16.mxu0 0
  %1583 = vmatpush2.bf16.msra.mxu0 %v1537
  %1584 = vmatprep.subr.bf16.mxu0 0
  %1585 = vmatpush2.bf16.msra.mxu0 %v1536
  %1586 = vmatprep.subr.bf16.mxu0 0
  %1587 = vmatpush2.bf16.msra.mxu0 %v1535
  %1588 = vmatprep.subr.bf16.mxu0 0
  %1589 = vmatpush2.bf16.msra.mxu0 %v1534
  %1590 = vmatprep.mubr.bf16.mxu0 %v1459
  %1591 = vmatmul.mubr.bf16.gmra.mxu0 %v1458
  %v1592 = vpop.f32.mrf.mxu0
  %v1593 = vadd.f32 0.0, %v1592
  %v1594 = vpop.f32.mrf.mxu0
  %v1595 = vpop.f32.mrf.mxu0
  %v1596 = vadd.f32 0.0, %v1595
  %v1597 = vpop.f32.mrf.mxu0
  %1598 = vdwg.mxu0
  %v1599 = vadd.f32 %v1217, %v1593
  %v1600 = vadd.f32 %v1221, %v1596
  %v1601 = vld [vmem:[%s8 + $0x1] sm:$0x1]
  %v1602 = vlaneseq
  %v1603 = vshrl.u32 %v1602, 7
  %v1604 = vsub.s32 0, %v1603
  %v1605 = vrot.slane %v1601, %v1604
  %v1606 = vadd.f32 %v1404, %v1605
  %v1607 = vadd.f32 %v1405, %v1605
  %v1608 = vmax.f32 %v1606, 0.0
  %v1609 = vmax.f32 %v1607, 0.0
  %v1610 = vpack.c.bf16 %v1609, %v1608
  %v1612 = vunpack.c.l.b16 %v1610
  %v1613 = vunpack.c.h.b16 %v1610
  %v1614 = vpack.c.b16 %v1612, %v1612
  %v1615 = vpack.c.b16 %v1613, %v1613
  %v1617 = vshrl.u32 %v1614, 16
  %v1619 = vrot.slane %v1617, 7
  %v1620 = vshll.u32 %v1614, 16
  %v1622 = vor.u32 %v1619, %v1620
  %v1623 = vrot.slane %v1619, 4
  %v1625 = vshrl.u32 %v1615, 16
  %v1627 = vrot.slane %v1625, 7
  %v1628 = vshll.u32 %v1615, 16
  %v1630 = vor.u32 %v1627, %v1628
  %v1631 = vrot.slane %v1627, 4
  %v1636 = vld [vmem:[#allocation4] sm:$0xf]
  %v1637 = vsel %vm116, %v1622, %v1636
  %1638 = vst [vmem:[#allocation4] sm:$0xf] %v1637
  %v1639 = vld [vmem:[#allocation4 + $0x8] sm:$0x1]
  %v1640 = vsel %vm35, %v1623, %v1639
  %1641 = vst [vmem:[#allocation4 + $0x8] sm:$0x1] %v1640
  %v1642 = vld [vmem:[#allocation4 + $0x10] sm:$0xf]
  %v1643 = vsel %vm116, %v1630, %v1642
  %1644 = vst [vmem:[#allocation4 + $0x10] sm:$0xf] %v1643
  %v1645 = vld [vmem:[#allocation4 + $0x18] sm:$0x1]
  %v1646 = vsel %vm35, %v1631, %v1645
  %1647 = vst [vmem:[#allocation4 + $0x18] sm:$0x1] %v1646
  %v1648 = vadd.f32 %v1599, %v1605
  %v1649 = vadd.f32 %v1600, %v1605
  %v1650 = vmax.f32 %v1648, 0.0
  %v1651 = vmax.f32 %v1649, 0.0
  %v1652 = vpack.c.bf16 %v1651, %v1650
  %v1654 = vunpack.c.l.b16 %v1652
  %v1655 = vunpack.c.h.b16 %v1652
  %v1656 = vpack.c.b16 %v1654, %v1654
  %v1657 = vpack.c.b16 %v1655, %v1655
  %v1659 = vshrl.u32 %v1656, 16
  %v1661 = vrot.slane %v1659, 7
  %v1662 = vshll.u32 %v1656, 16
  %v1664 = vor.u32 %v1661, %v1662
  %v1665 = vrot.slane %v1661, 4
  %v1667 = vshrl.u32 %v1657, 16
  %v1669 = vrot.slane %v1667, 7
  %v1670 = vshll.u32 %v1657, 16
  %v1672 = vor.u32 %v1669, %v1670
  %v1673 = vrot.slane %v1669, 4
  %v1678 = vld [vmem:[#allocation4 + $0x4] sm:$0xf]
  %v1679 = vsel %vm116, %v1664, %v1678
  %1680 = vst [vmem:[#allocation4 + $0x4] sm:$0xf] %v1679
  %v1681 = vld [vmem:[#allocation4 + $0xc] sm:$0x1]
  %v1682 = vsel %vm35, %v1665, %v1681
  %1683 = vst [vmem:[#allocation4 + $0xc] sm:$0x1] %v1682
  %v1684 = vld [vmem:[#allocation4 + $0x14] sm:$0xf]
  %v1685 = vsel %vm116, %v1672, %v1684
  %1686 = vst [vmem:[#allocation4 + $0x14] sm:$0xf] %v1685
  %v1687 = vld [vmem:[#allocation4 + $0x1c] sm:$0x1]
  %v1688 = vsel %vm35, %v1673, %v1687
  %1689 = vst [vmem:[#allocation4 + $0x1c] sm:$0x1] %v1688
  %v1690 = vld [vmem:[#allocation4] sm:$0xff]
  %v1691 = vld [vmem:[#allocation4 + $0x8] sm:$0x11]
  %v1692 = vld [vmem:[#allocation4 + $0x10] sm:$0xff]
  %v1693 = vld [vmem:[#allocation4 + $0x18] sm:$0x11]
  %v1695 = vshrl.u32 %v1690, 16
  %v1697 = vrot.slane %v1695, 4
  %v1698 = vshll.u32 %v1690, 16
  %v1700 = vrot.slane %v1698, 5
  %v1701 = vor.u32 %v1697, %v1700
  %v1702 = vrot.slane %v1701, 4
  %v1704 = vshll.u32 %v1691, 16
  %v1706 = vrot.slane %v1704, 5
  %v1707 = vsel %vm680, %v1702, %v1706
  %v1709 = vshrl.u32 %v1692, 16
  %v1711 = vrot.slane %v1709, 4
  %v1712 = vshll.u32 %v1692, 16
  %v1714 = vrot.slane %v1712, 5
  %v1715 = vor.u32 %v1711, %v1714
  %v1716 = vrot.slane %v1715, 4
  %v1718 = vshll.u32 %v1693, 16
  %v1720 = vrot.slane %v1718, 5
  %v1721 = vsel %vm680, %v1716, %v1720
  %v1722 = vld [vmem:[%s6] sm:$0xff]
  %v1723 = vld [vmem:[%s6 + $0x8] sm:$0xff]
  %v1724 = vld [vmem:[%s6 + $0x10] sm:$0xff]
  %v1725 = vld [vmem:[%s6 + $0x18] sm:$0xff]
  %v1726 = vld [vmem:[%s6 + $0x20] sm:$0xff]
  %v1727 = vld [vmem:[%s6 + $0x28] sm:$0xff]
  %v1728 = vld [vmem:[%s6 + $0x30] sm:$0xff]
  %v1729 = vld [vmem:[%s6 + $0x38] sm:$0xff]
  %v1730 = vld [vmem:[%s6 + $0x40] sm:$0xff]
  %v1731 = vld [vmem:[%s6 + $0x48] sm:$0xff]
  %v1732 = vld [vmem:[%s6 + $0x50] sm:$0xff]
  %v1733 = vld [vmem:[%s6 + $0x58] sm:$0xff]
  %v1734 = vld [vmem:[%s6 + $0x60] sm:$0xff]
  %v1735 = vld [vmem:[%s6 + $0x68] sm:$0xff]
  %v1736 = vld [vmem:[%s6 + $0x70] sm:$0xff]
  %v1737 = vld [vmem:[%s6 + $0x78] sm:$0xff]
  %v1738 = vld [vmem:[%s6 + $0x80] sm:$0xff]
  %v1739 = vld [vmem:[%s6 + $0x88] sm:$0xff]
  %v1740 = vld [vmem:[%s6 + $0x90] sm:$0xff]
  %v1741 = vld [vmem:[%s6 + $0x98] sm:$0xff]
  %v1742 = vld [vmem:[%s6 + $0xa0] sm:$0xff]
  %v1743 = vld [vmem:[%s6 + $0xa8] sm:$0xff]
  %v1744 = vld [vmem:[%s6 + $0xb0] sm:$0xff]
  %v1745 = vld [vmem:[%s6 + $0xb8] sm:$0xff]
  %v1746 = vld [vmem:[%s6 + $0xc0] sm:$0xff]
  %v1747 = vld [vmem:[%s6 + $0xc8] sm:$0xff]
  %v1748 = vld [vmem:[%s6 + $0xd0] sm:$0xff]
  %v1749 = vld [vmem:[%s6 + $0xd8] sm:$0xff]
  %v1750 = vld [vmem:[%s6 + $0xe0] sm:$0xff]
  %v1751 = vld [vmem:[%s6 + $0xe8] sm:$0xff]
  %v1752 = vld [vmem:[%s6 + $0xf0] sm:$0xff]
  %v1753 = vld [vmem:[%s6 + $0xf8] sm:$0xff]
  %v1754 = vunpack.c.l.b16 %v1707
  %v1755 = vunpack.c.h.b16 %v1707
  %v1756 = vunpack.c.l.b16 %v1721
  %v1757 = vunpack.c.h.b16 %v1721
  %v1758 = vpack.c.b16 %v1756, %v1754
  %v1759 = vpack.c.b16 %v1757, %v1755
  %v1794 = vunpack.c.l.b16 %v1722
  %v1795 = vunpack.c.h.b16 %v1722
  %v1796 = vunpack.c.l.b16 %v1723
  %v1797 = vunpack.c.h.b16 %v1723
  %v1798 = vunpack.c.l.b16 %v1724
  %v1799 = vunpack.c.h.b16 %v1724
  %v1800 = vunpack.c.l.b16 %v1725
  %v1801 = vunpack.c.h.b16 %v1725
  %v1802 = vunpack.c.l.b16 %v1726
  %v1803 = vunpack.c.h.b16 %v1726
  %v1804 = vunpack.c.l.b16 %v1727
  %v1805 = vunpack.c.h.b16 %v1727
  %v1806 = vunpack.c.l.b16 %v1728
  %v1807 = vunpack.c.h.b16 %v1728
  %v1808 = vunpack.c.l.b16 %v1729
  %v1809 = vunpack.c.h.b16 %v1729
  %v1810 = vunpack.c.l.b16 %v1730
  %v1811 = vunpack.c.h.b16 %v1730
  %v1812 = vunpack.c.l.b16 %v1731
  %v1813 = vunpack.c.h.b16 %v1731
  %v1814 = vunpack.c.l.b16 %v1732
  %v1815 = vunpack.c.h.b16 %v1732
  %v1816 = vunpack.c.l.b16 %v1733
  %v1817 = vunpack.c.h.b16 %v1733
  %v1818 = vunpack.c.l.b16 %v1734
  %v1819 = vunpack.c.h.b16 %v1734
  %v1820 = vunpack.c.l.b16 %v1735
  %v1821 = vunpack.c.h.b16 %v1735
  %v1822 = vunpack.c.l.b16 %v1736
  %v1823 = vunpack.c.h.b16 %v1736
  %v1824 = vunpack.c.l.b16 %v1737
  %v1825 = vunpack.c.h.b16 %v1737
  %v1826 = vunpack.c.l.b16 %v1738
  %v1827 = vunpack.c.h.b16 %v1738
  %v1828 = vunpack.c.l.b16 %v1739
  %v1829 = vunpack.c.h.b16 %v1739
  %v1830 = vunpack.c.l.b16 %v1740
  %v1831 = vunpack.c.h.b16 %v1740
  %v1832 = vunpack.c.l.b16 %v1741
  %v1833 = vunpack.c.h.b16 %v1741
  %v1834 = vunpack.c.l.b16 %v1742
  %v1835 = vunpack.c.h.b16 %v1742
  %v1836 = vunpack.c.l.b16 %v1743
  %v1837 = vunpack.c.h.b16 %v1743
  %v1838 = vunpack.c.l.b16 %v1744
  %v1839 = vunpack.c.h.b16 %v1744
  %v1840 = vunpack.c.l.b16 %v1745
  %v1841 = vunpack.c.h.b16 %v1745
  %v1842 = vunpack.c.l.b16 %v1746
  %v1843 = vunpack.c.h.b16 %v1746
  %v1844 = vunpack.c.l.b16 %v1747
  %v1845 = vunpack.c.h.b16 %v1747
  %v1846 = vunpack.c.l.b16 %v1748
  %v1847 = vunpack.c.h.b16 %v1748
  %v1848 = vunpack.c.l.b16 %v1749
  %v1849 = vunpack.c.h.b16 %v1749
  %v1850 = vunpack.c.l.b16 %v1750
  %v1851 = vunpack.c.h.b16 %v1750
  %v1852 = vunpack.c.l.b16 %v1751
  %v1853 = vunpack.c.h.b16 %v1751
  %v1854 = vunpack.c.l.b16 %v1752
  %v1855 = vunpack.c.h.b16 %v1752
  %v1856 = vunpack.c.l.b16 %v1753
  %v1857 = vunpack.c.h.b16 %v1753
  %v1858 = vpack.c.b16 %v1796, %v1794
  %v1859 = vpack.c.b16 %v1797, %v1795
  %v1860 = vpack.c.b16 %v1800, %v1798
  %v1861 = vpack.c.b16 %v1801, %v1799
  %v1862 = vpack.c.b16 %v1804, %v1802
  %v1863 = vpack.c.b16 %v1805, %v1803
  %v1864 = vpack.c.b16 %v1808, %v1806
  %v1865 = vpack.c.b16 %v1809, %v1807
  %v1866 = vpack.c.b16 %v1812, %v1810
  %v1867 = vpack.c.b16 %v1813, %v1811
  %v1868 = vpack.c.b16 %v1816, %v1814
  %v1869 = vpack.c.b16 %v1817, %v1815
  %v1870 = vpack.c.b16 %v1820, %v1818
  %v1871 = vpack.c.b16 %v1821, %v1819
  %v1872 = vpack.c.b16 %v1824, %v1822
  %v1873 = vpack.c.b16 %v1825, %v1823
  %v1874 = vpack.c.b16 %v1828, %v1826
  %v1875 = vpack.c.b16 %v1829, %v1827
  %v1876 = vpack.c.b16 %v1832, %v1830
  %v1877 = vpack.c.b16 %v1833, %v1831
  %v1878 = vpack.c.b16 %v1836, %v1834
  %v1879 = vpack.c.b16 %v1837, %v1835
  %v1880 = vpack.c.b16 %v1840, %v1838
  %v1881 = vpack.c.b16 %v1841, %v1839
  %v1882 = vpack.c.b16 %v1844, %v1842
  %v1883 = vpack.c.b16 %v1845, %v1843
  %v1884 = vpack.c.b16 %v1848, %v1846
  %v1885 = vpack.c.b16 %v1849, %v1847
  %v1886 = vpack.c.b16 %v1852, %v1850
  %v1887 = vpack.c.b16 %v1853, %v1851
  %v1888 = vpack.c.b16 %v1856, %v1854
  %v1889 = vpack.c.b16 %v1857, %v1855
  %1922 = vmatprep.subr.bf16.mxu0 %v1873
  %1923 = vmatpush1.bf16.msra.mxu0 %v1872
  %1924 = vmatprep.subr.bf16.mxu0 %v1871
  %1925 = vmatpush1.bf16.msra.mxu0 %v1870
  %1926 = vmatprep.subr.bf16.mxu0 %v1869
  %1927 = vmatpush1.bf16.msra.mxu0 %v1868
  %1928 = vmatprep.subr.bf16.mxu0 %v1867
  %1929 = vmatpush1.bf16.msra.mxu0 %v1866
  %1930 = vmatprep.subr.bf16.mxu0 %v1865
  %1931 = vmatpush1.bf16.msra.mxu0 %v1864
  %1932 = vmatprep.subr.bf16.mxu0 %v1863
  %1933 = vmatpush1.bf16.msra.mxu0 %v1862
  %1934 = vmatprep.subr.bf16.mxu0 %v1861
  %1935 = vmatpush1.bf16.msra.mxu0 %v1860
  %1936 = vmatprep.subr.bf16.mxu0 %v1859
  %1937 = vmatpush1.bf16.msra.mxu0 %v1858
  %1938 = vmatprep.subr.bf16.mxu0 %v1889
  %1939 = vmatpush2.bf16.msra.mxu0 %v1888
  %1940 = vmatprep.subr.bf16.mxu0 %v1887
  %1941 = vmatpush2.bf16.msra.mxu0 %v1886
  %1942 = vmatprep.subr.bf16.mxu0 %v1885
  %1943 = vmatpush2.bf16.msra.mxu0 %v1884
  %1944 = vmatprep.subr.bf16.mxu0 %v1883
  %1945 = vmatpush2.bf16.msra.mxu0 %v1882
  %1946 = vmatprep.subr.bf16.mxu0 %v1881
  %1947 = vmatpush2.bf16.msra.mxu0 %v1880
  %1948 = vmatprep.subr.bf16.mxu0 %v1879
  %1949 = vmatpush2.bf16.msra.mxu0 %v1878
  %1950 = vmatprep.subr.bf16.mxu0 %v1877
  %1951 = vmatpush2.bf16.msra.mxu0 %v1876
  %1952 = vmatprep.subr.bf16.mxu0 %v1875
  %1953 = vmatpush2.bf16.msra.mxu0 %v1874
  %1954 = vmatprep.mubr.bf16.mxu0 %v1759
  %1955 = vmatmul.mubr.bf16.gmra.mxu0 %v1758
  %v1956 = vpop.f32.mrf.mxu0
  %v1957 = vadd.f32 0.0, %v1956
  %v1958 = vpop.f32.mrf.mxu0
  %v1959 = vadd.f32 0.0, %v1958
  %v1960 = vpop.f32.mrf.mxu0
  %v1961 = vadd.f32 0.0, %v1960
  %v1962 = vpop.f32.mrf.mxu0
  %v1963 = vadd.f32 0.0, %v1962
  %1964 = vdwg.mxu0
  %v1965 = vld [vmem:[#allocation4 + $0x4] sm:$0xf]
  %v1966 = vld [vmem:[#allocation4 + $0x14] sm:$0xf]
  %v1967 = vld [vmem:[%s7] sm:$0xf]
  %v1968 = vld [vmem:[%s7 + $0x8] sm:$0xf]
  %v1969 = vld [vmem:[%s7 + $0x10] sm:$0xf]
  %v1970 = vld [vmem:[%s7 + $0x18] sm:$0xf]
  %v1971 = vld [vmem:[%s7 + $0x20] sm:$0xf]
  %v1972 = vld [vmem:[%s7 + $0x28] sm:$0xf]
  %v1973 = vld [vmem:[%s7 + $0x30] sm:$0xf]
  %v1974 = vld [vmem:[%s7 + $0x38] sm:$0xf]
  %v1975 = vld [vmem:[%s7 + $0x40] sm:$0xf]
  %v1976 = vld [vmem:[%s7 + $0x48] sm:$0xf]
  %v1977 = vld [vmem:[%s7 + $0x50] sm:$0xf]
  %v1978 = vld [vmem:[%s7 + $0x58] sm:$0xf]
  %v1979 = vld [vmem:[%s7 + $0x60] sm:$0xf]
  %v1980 = vld [vmem:[%s7 + $0x68] sm:$0xf]
  %v1981 = vld [vmem:[%s7 + $0x70] sm:$0xf]
  %v1982 = vld [vmem:[%s7 + $0x78] sm:$0xf]
  %v1985 = vunpack.c.l.b16 %v1965
  %v1986 = vunpack.c.l.b16 %v1966
  %v1987 = vpack.c.b16 %v1986, %v1985
  %v2005 = vunpack.c.l.b16 %v1967
  %v2006 = vunpack.c.l.b16 %v1968
  %v2007 = vunpack.c.l.b16 %v1969
  %v2008 = vunpack.c.l.b16 %v1970
  %v2009 = vunpack.c.l.b16 %v1971
  %v2010 = vunpack.c.l.b16 %v1972
  %v2011 = vunpack.c.l.b16 %v1973
  %v2012 = vunpack.c.l.b16 %v1974
  %v2013 = vunpack.c.l.b16 %v1975
  %v2014 = vunpack.c.l.b16 %v1976
  %v2015 = vunpack.c.l.b16 %v1977
  %v2016 = vunpack.c.l.b16 %v1978
  %v2017 = vunpack.c.l.b16 %v1979
  %v2018 = vunpack.c.l.b16 %v1980
  %v2019 = vunpack.c.l.b16 %v1981
  %v2020 = vunpack.c.l.b16 %v1982
  %v2021 = vpack.c.b16 %v2006, %v2005
  %v2022 = vpack.c.b16 %v2008, %v2007
  %v2023 = vpack.c.b16 %v2010, %v2009
  %v2024 = vpack.c.b16 %v2012, %v2011
  %v2025 = vpack.c.b16 %v2014, %v2013
  %v2026 = vpack.c.b16 %v2016, %v2015
  %v2027 = vpack.c.b16 %v2018, %v2017
  %v2028 = vpack.c.b16 %v2020, %v2019
  %2037 = vmatprep.subr.bf16.mxu0 0
  %2038 = vmatpush1.bf16.msra.mxu0 %v2028
  %2039 = vmatprep.subr.bf16.mxu0 0
  %2040 = vmatpush1.bf16.msra.mxu0 %v2027
  %2041 = vmatprep.subr.bf16.mxu0 0
  %2042 = vmatpush1.bf16.msra.mxu0 %v2026
  %2043 = vmatprep.subr.bf16.mxu0 0
  %2044 = vmatpush1.bf16.msra.mxu0 %v2025
  %2045 = vmatprep.subr.bf16.mxu0 0
  %2046 = vmatpush1.bf16.msra.mxu0 %v2024
  %2047 = vmatprep.subr.bf16.mxu0 0
  %2048 = vmatpush1.bf16.msra.mxu0 %v2023
  %2049 = vmatprep.subr.bf16.mxu0 0
  %2050 = vmatpush1.bf16.msra.mxu0 %v2022
  %2051 = vmatprep.subr.bf16.mxu0 0
  %2052 = vmatpush1.bf16.msra.mxu0 %v2021
  %2053 = vmatprep.subr.bf16.mxu0 0
  %2054 = vmatpush2.bf16.msra.mxu0 0
  %2055 = vmatprep.subr.bf16.mxu0 0
  %2056 = vmatpush2.bf16.msra.mxu0 0
  %2057 = vmatprep.subr.bf16.mxu0 0
  %2058 = vmatpush2.bf16.msra.mxu0 0
  %2059 = vmatprep.subr.bf16.mxu0 0
  %2060 = vmatpush2.bf16.msra.mxu0 0
  %2061 = vmatprep.subr.bf16.mxu0 0
  %2062 = vmatpush2.bf16.msra.mxu0 0
  %2063 = vmatprep.subr.bf16.mxu0 0
  %2064 = vmatpush2.bf16.msra.mxu0 0
  %2065 = vmatprep.subr.bf16.mxu0 0
  %2066 = vmatpush2.bf16.msra.mxu0 0
  %2067 = vmatprep.subr.bf16.mxu0 0
  %2068 = vmatpush2.bf16.msra.mxu0 0
  %2069 = vmatprep.mubr.bf16.mxu0 0
  %2070 = vmatmul.mubr.bf16.gmra.mxu0 %v1987
  %v2071 = vpop.f32.mrf.mxu0
  %v2072 = vadd.f32 0.0, %v2071
  %v2073 = vpop.f32.mrf.mxu0
  %v2074 = vpop.f32.mrf.mxu0
  %v2075 = vadd.f32 0.0, %v2074
  %v2076 = vpop.f32.mrf.mxu0
  %2077 = vdwg.mxu0
  %v2078 = vadd.f32 %v1957, %v2072
  %v2079 = vadd.f32 %v1961, %v2075
  %v2080 = vld [vmem:[#allocation4] sm:$0xe]
  %v2081 = vld [vmem:[#allocation4 + $0x8] sm:$0x1]
  %v2082 = vld [vmem:[#allocation4 + $0x10] sm:$0xe]
  %v2083 = vld [vmem:[#allocation4 + $0x18] sm:$0x1]
  %v2088 = vrot.slane %v2080, 5
  %v2089 = vrot.slane %v2088, 4
  %v2090 = vrot.slane %v2081, 5
  %v2091 = vsel %vm211, %v2089, %v2090
  %v2092 = vrot.slane %v2082, 5
  %v2093 = vrot.slane %v2092, 4
  %v2094 = vrot.slane %v2083, 5
  %v2095 = vsel %vm211, %v2093, %v2094
  %v2096 = vld [vmem:[%s7 + $0x4] sm:$0xf]
  %v2097 = vld [vmem:[%s7 + $0xc] sm:$0xf]
  %v2098 = vld [vmem:[%s7 + $0x14] sm:$0xf]
  %v2099 = vld [vmem:[%s7 + $0x1c] sm:$0xf]
  %v2100 = vld [vmem:[%s7 + $0x24] sm:$0xf]
  %v2101 = vld [vmem:[%s7 + $0x2c] sm:$0xf]
  %v2102 = vld [vmem:[%s7 + $0x34] sm:$0xf]
  %v2103 = vld [vmem:[%s7 + $0x3c] sm:$0xf]
  %v2104 = vld [vmem:[%s7 + $0x44] sm:$0xf]
  %v2105 = vld [vmem:[%s7 + $0x4c] sm:$0xf]
  %v2106 = vld [vmem:[%s7 + $0x54] sm:$0xf]
  %v2107 = vld [vmem:[%s7 + $0x5c] sm:$0xf]
  %v2108 = vld [vmem:[%s7 + $0x64] sm:$0xf]
  %v2109 = vld [vmem:[%s7 + $0x6c] sm:$0xf]
  %v2110 = vld [vmem:[%s7 + $0x74] sm:$0xf]
  %v2111 = vld [vmem:[%s7 + $0x7c] sm:$0xf]
  %v2112 = vunpack.c.l.b16 %v2091
  %v2113 = vunpack.c.l.b16 %v2095
  %v2114 = vpack.c.b16 %v2113, %v2112
  %v2132 = vunpack.c.l.b16 %v2096
  %v2133 = vunpack.c.l.b16 %v2097
  %v2134 = vunpack.c.l.b16 %v2098
  %v2135 = vunpack.c.l.b16 %v2099
  %v2136 = vunpack.c.l.b16 %v2100
  %v2137 = vunpack.c.l.b16 %v2101
  %v2138 = vunpack.c.l.b16 %v2102
  %v2139 = vunpack.c.l.b16 %v2103
  %v2140 = vunpack.c.l.b16 %v2104
  %v2141 = vunpack.c.l.b16 %v2105
  %v2142 = vunpack.c.l.b16 %v2106
  %v2143 = vunpack.c.l.b16 %v2107
  %v2144 = vunpack.c.l.b16 %v2108
  %v2145 = vunpack.c.l.b16 %v2109
  %v2146 = vunpack.c.l.b16 %v2110
  %v2147 = vunpack.c.l.b16 %v2111
  %v2148 = vpack.c.b16 %v2133, %v2132
  %v2149 = vpack.c.b16 %v2135, %v2134
  %v2150 = vpack.c.b16 %v2137, %v2136
  %v2151 = vpack.c.b16 %v2139, %v2138
  %v2152 = vpack.c.b16 %v2141, %v2140
  %v2153 = vpack.c.b16 %v2143, %v2142
  %v2154 = vpack.c.b16 %v2145, %v2144
  %v2155 = vpack.c.b16 %v2147, %v2146
  %2164 = vmatprep.subr.bf16.mxu0 0
  %2165 = vmatpush1.bf16.msra.mxu0 %v2155
  %2166 = vmatprep.subr.bf16.mxu0 0
  %2167 = vmatpush1.bf16.msra.mxu0 %v2154
  %2168 = vmatprep.subr.bf16.mxu0 0
  %2169 = vmatpush1.bf16.msra.mxu0 %v2153
  %2170 = vmatprep.subr.bf16.mxu0 0
  %2171 = vmatpush1.bf16.msra.mxu0 %v2152
  %2172 = vmatprep.subr.bf16.mxu0 0
  %2173 = vmatpush1.bf16.msra.mxu0 %v2151
  %2174 = vmatprep.subr.bf16.mxu0 0
  %2175 = vmatpush1.bf16.msra.mxu0 %v2150
  %2176 = vmatprep.subr.bf16.mxu0 0
  %2177 = vmatpush1.bf16.msra.mxu0 %v2149
  %2178 = vmatprep.subr.bf16.mxu0 0
  %2179 = vmatpush1.bf16.msra.mxu0 %v2148
  %2180 = vmatprep.subr.bf16.mxu0 0
  %2181 = vmatpush2.bf16.msra.mxu0 0
  %2182 = vmatprep.subr.bf16.mxu0 0
  %2183 = vmatpush2.bf16.msra.mxu0 0
  %2184 = vmatprep.subr.bf16.mxu0 0
  %2185 = vmatpush2.bf16.msra.mxu0 0
  %2186 = vmatprep.subr.bf16.mxu0 0
  %2187 = vmatpush2.bf16.msra.mxu0 0
  %2188 = vmatprep.subr.bf16.mxu0 0
  %2189 = vmatpush2.bf16.msra.mxu0 0
  %2190 = vmatprep.subr.bf16.mxu0 0
  %2191 = vmatpush2.bf16.msra.mxu0 0
  %2192 = vmatprep.subr.bf16.mxu0 0
  %2193 = vmatpush2.bf16.msra.mxu0 0
  %2194 = vmatprep.subr.bf16.mxu0 0
  %2195 = vmatpush2.bf16.msra.mxu0 0
  %2196 = vmatprep.mubr.bf16.mxu0 0
  %2197 = vmatmul.mubr.bf16.gmra.mxu0 %v2114
  %v2198 = vpop.f32.mrf.mxu0
  %v2199 = vadd.f32 0.0, %v2198
  %v2200 = vpop.f32.mrf.mxu0
  %v2201 = vpop.f32.mrf.mxu0
  %v2202 = vadd.f32 0.0, %v2201
  %v2203 = vpop.f32.mrf.mxu0
  %2204 = vdwg.mxu0
  %v2205 = vadd.f32 %v1959, %v2199
  %v2206 = vadd.f32 %v1963, %v2202
  %v2207 = vld [vmem:[%s8 + $0x2] sm:$0x1]
  %v2208 = vlaneseq
  %v2209 = vshrl.u32 %v2208, 7
  %v2210 = vsub.s32 0, %v2209
  %v2211 = vrot.slane %v2207, %v2210
  %v2212 = vadd.f32 %v2078, %v2211
  %v2213 = vadd.f32 %v2079, %v2211
  %v2214 = vmax.f32 %v2212, 0.0
  %v2215 = vmax.f32 %v2213, 0.0
  %v2216 = vpack.c.bf16 %v2215, %v2214
  %v2217 = vadd.f32 %v2205, %v2211
  %v2218 = vadd.f32 %v2206, %v2211
  %v2219 = vmax.f32 %v2217, 0.0
  %v2220 = vmax.f32 %v2218, 0.0
  %v2221 = vpack.c.bf16 %v2220, %v2219
  %v2224 = vunpack.c.l.b16 %v2216
  %v2225 = vunpack.c.l.b16 %v2221
  %v2226 = vunpack.c.h.b16 %v2216
  %v2227 = vunpack.c.h.b16 %v2221
  %v2228 = vpack.c.b16 %v2225, %v2224
  %v2229 = vpack.c.b16 %v2227, %v2226
  %2232 = vst [vmem:[%s9] sm:$0xff] %v2228
  %2233 = vst [vmem:[%s9 + $0x8] sm:$0xff] %v2229
  // Predicated region
  $region38: #{unet_up_forward.1} parent=0 // pred_check
    _
  $region39: #{unet_up_forward.1} parent=0 // pred_check_branch
    %2235 = sbr.rel (0) target = $region41
  $region40: #{unet_up_forward.1} parent=0 // pred_region
    _
  $region41: #{unet_up_forward.1} parent=0 // pred_fallthru
    _
  // Predicated region
  $region42: #{unet_up_forward.1} parent=0 // pred_check
    _
  $region43: #{unet_up_forward.1} parent=0 // pred_check_branch
    %2237 = sbr.rel (0) target = $region45
  $region44: #{unet_up_forward.1} parent=0 // pred_region
    _
  $region45: #{unet_up_forward.1} parent=0 // pred_fallthru
    _

</llo_original>
